<compile_context>
chip_gen: v7x
topology: tpu7x:2x2x1
jax: 0.10.0
libtpu: 0.0.40
codegen_flags: <defaults>
</compile_context>

<pallas_src>
import functools
import math

import jax
import jax.numpy as jnp
from jax.experimental import pallas as pl
from jax.experimental.pallas import tpu as pltpu


_INV_SQRT2 = 0.7071067811865476


def _erf_approx(x):
    # Abramowitz & Stegun 7.1.26 (max abs error ~1.5e-7) -> fp32-accurate GELU.
    # Only VPU/EUP-friendly ops; the rational term uses the EUP reciprocal.
    a1, a2, a3, a4, a5 = 0.254829592, -0.284496736, 1.421413741, -1.453152027, 1.061405429
    pp = 0.3275911
    ax = jnp.abs(x)
    t = pl.reciprocal(1.0 + pp * ax, approx=True)
    poly = ((((a5 * t + a4) * t + a3) * t + a2) * t + a1) * t
    y = 1.0 - poly * jnp.exp(-ax * ax)
    return jnp.where(x >= 0, y, -y)


def _mha_ln1_kernel(x_ref, wqkv_ref, bqkv_ref, wo_ref, bo_ref, g1_ref, beta1_ref,
                    o_ref, *, n_heads, eps):
    # x_ref: (TB, S, H) fp32; weight refs are bf16 and VMEM-resident across the grid.
    TB, S, H = x_ref.shape
    dh = H // n_heads
    scale = 1.0 / math.sqrt(dh)

    x = x_ref[...]                                   # (TB, S, H) fp32 (kept for residual)
    # Collapse (TB, S) -> rows: MXU-friendly M dim for the projections.
    # Free reshape (leading dims only; S is a multiple of 8 here).
    x2d = x.reshape(TB * S, H)

    # Fused QKV projection: bf16 operands, fp32 MXU accumulate.
    qkv = jnp.dot(x2d.astype(jnp.bfloat16), wqkv_ref[...],
                  preferred_element_type=jnp.float32) + bqkv_ref[...]    # (TB*S, 3H) fp32

    wo = wo_ref[...]                                 # (H, H) bf16
    bo = bo_ref[...]
    g1 = g1_ref[...]
    beta1 = beta1_ref[...]

    # Per (batch, head) scaled dot-product attention.  Each head's output is
    # pushed straight through its dh rows of the output projection and summed
    # into an fp32 accumulator, so there is no jnp.concatenate / head relayout.
    # TODO(synk): for large S / n_heads use lax.fori_loop + online softmax to
    # bound live (S, S) score buffers instead of this static Python loop.
    for b in range(TB):
        r0 = b * S
        acc = jnp.zeros((S, H), jnp.float32)
        for h in range(n_heads):
            q_lo = h * dh
            k_lo = H + h * dh
            v_lo = 2 * H + h * dh
            qh = (qkv[r0:r0 + S, q_lo:q_lo + dh] * scale).astype(jnp.bfloat16)
            kh = qkv[r0:r0 + S, k_lo:k_lo + dh].astype(jnp.bfloat16)
            vh = qkv[r0:r0 + S, v_lo:v_lo + dh].astype(jnp.bfloat16)
            # q @ k^T as an NT matmul (no materialized transpose).
            s = jax.lax.dot_general(qh, kh, (((1,), (1,)), ((), ())),
                                    preferred_element_type=jnp.float32)  # (S, S) fp32
            s = s - jnp.max(s, axis=-1, keepdims=True)                   # stable softmax
            e = jnp.exp(s)
            p = e * pl.reciprocal(jnp.sum(e, axis=-1, keepdims=True), approx=True)
            hv = jnp.dot(p.astype(jnp.bfloat16), vh,
                         preferred_element_type=jnp.float32)             # (S, dh) fp32
            # This head's slice of the output projection, accumulated in fp32.
            acc = acc + jnp.dot(hv.astype(jnp.bfloat16), wo[q_lo:q_lo + dh, :],
                                preferred_element_type=jnp.float32)
        mh = acc + bo                                                    # (S, H)

        # dropout_mha is identity in eval mode; residual + LayerNorm1 fused.
        y = x[b] + mh
        mu = jnp.mean(y, axis=-1, keepdims=True)
        d = y - mu
        var = jnp.mean(d * d, axis=-1, keepdims=True)
        o_ref[b] = (d * jax.lax.rsqrt(var + eps)) * g1 + beta1


def _ffn_ln2_kernel(y_ref, w1_ref, b1_ref, w2_ref, b2_ref, g2_ref, beta2_ref,
                    o_ref, *, eps):
    # y_ref: (TILE_N, H) fp32 tile of the flattened (N, H) activations.
    y = y_ref[...]
    h = jnp.dot(y.astype(jnp.bfloat16), w1_ref[...],
                preferred_element_type=jnp.float32) + b1_ref[...]
    # Exact-erf GELU (PyTorch nn.GELU default); dropout1/dropout2 identity in eval.
    h = 0.5 * h * (1.0 + _erf_approx(h * _INV_SQRT2))
    f = jnp.dot(h.astype(jnp.bfloat16), w2_ref[...],
                preferred_element_type=jnp.float32) + b2_ref[...]
    # Residual + LayerNorm2 fused (fp32).
    z = y + f
    mu = jnp.mean(z, axis=-1, keepdims=True)
    d = z - mu
    var = jnp.mean(d * d, axis=-1, keepdims=True)
    o_ref[...] = (d * jax.lax.rsqrt(var + eps)) * g2_ref[...] + beta2_ref[...]


def _vmem_budget_bytes():
    """Per-generation scoped-VMEM budget (v5e/v6e: 128 MiB, v7x: 64 MiB per TC)."""
    try:
        cap = int(pltpu.get_tpu_info().vmem_capacity_bytes)
    except Exception:
        cap = 64 * 1024 * 1024          # v7x floor: the most conservative choice
    return max(32 * 1024 * 1024, int(cap * 0.8))


def _pick_seq_block(B, S, max_rows=512):
    """Largest divisor TB of B with TB*S <= max_rows (fills the MXU M dim)."""
    tb = 1
    for t in range(1, B + 1):
        if B % t == 0 and t * S <= max(S, max_rows):
            tb = t
    return tb


def _largest_divisor_tile(n, cap, step=8):
    """Largest multiple-of-`step` divisor of n that is <= cap (or n itself)."""
    cap = max(step, min(n, cap))
    if n <= cap:
        return n
    t = cap - (cap % step)
    while t >= step:
        if n % t == 0:
            return t
        t -= step
    # TODO(synk): no multiple-of-8 divisor fits; the padded tail block flows
    # through the LayerNorm on garbage rows (output stays correct via masking).
    return cap - (cap % step)


def attention_block_forward(x, params, eps=1e-5):
    """x: (B, S, H) float32 -> (B, S, H) float32 (batch-first layout)."""
    B, S, H = x.shape
    n_heads = params["n_heads"]
    assert H % n_heads == 0

    # Store matmul weights as bf16 (halves DMA + resident VMEM); biases / LN
    # parameters stay fp32 since they are added after the fp32 accumulate.
    wqkv = params["wqkv"].astype(jnp.bfloat16)
    wo = params["wo"].astype(jnp.bfloat16)
    w1 = params["w1"].astype(jnp.bfloat16)
    w2 = params["w2"].astype(jnp.bfloat16)
    bqkv, bo = params["bqkv"], params["bo"]
    g1, beta1 = params["ln1_g"], params["ln1_b"]
    b1, b2 = params["b1"], params["b2"]
    g2, beta2 = params["ln2_g"], params["ln2_b"]
    inter = w1.shape[1]

    vmem_limit = _vmem_budget_bytes()

    # --- Kernel 1: MHA + residual + LayerNorm1, TB sequences per grid step ---
    TB = _pick_seq_block(B, S)
    attn_cost = pl.CostEstimate(
        flops=int(B * (2 * S * H * 3 * H + 4 * S * S * H + 2 * S * H * H)),
        transcendentals=int(B * n_heads * S * S),
        bytes_accessed=int(8 * B * S * H + 2 * (3 * H * H + H * H) + 4 * 7 * H),
    )
    y = pl.pallas_call(
        functools.partial(_mha_ln1_kernel, n_heads=n_heads, eps=eps),
        out_shape=jax.ShapeDtypeStruct((B, S, H), jnp.float32),
        grid=(B // TB,),
        in_specs=[
            pl.BlockSpec((TB, S, H), lambda b: (b, 0, 0)),
            pl.BlockSpec((H, 3 * H), lambda b: (0, 0)),   # weights stay VMEM-resident
            pl.BlockSpec((1, 3 * H), lambda b: (0, 0)),
            pl.BlockSpec((H, H), lambda b: (0, 0)),
            pl.BlockSpec((1, H), lambda b: (0, 0)),
            pl.BlockSpec((1, H), lambda b: (0, 0)),
            pl.BlockSpec((1, H), lambda b: (0, 0)),
        ],
        out_specs=pl.BlockSpec((TB, S, H), lambda b: (b, 0, 0)),
        compiler_params=pltpu.CompilerParams(
            dimension_semantics=("parallel",),
            vmem_limit_bytes=vmem_limit),
        cost_estimate=attn_cost,
    )(x, wqkv, bqkv, wo, bo, g1, beta1)

    # --- Kernel 2: position-wise FFN + residual + LayerNorm2, tiled over rows ---
    N = B * S
    # VMEM budget: bf16 FFN weights (double-buffered) + fp32 biases/gains +
    # fp32 in/out row tiles (double-buffered) + the (TILE_N, inter) fp32
    # intermediate; keep a 2x headroom factor.
    weight_bytes = 2 * 2 * (H * inter + inter * H) + 2 * 4 * (inter + 3 * H)
    per_row_bytes = 4 * (4 * H + 3 * inter)
    row_cap = max(8, (vmem_limit // 2 - weight_bytes) // per_row_bytes)
    TILE_N = _largest_divisor_tile(N, min(int(row_cap), 1024))
    n_tiles = pl.cdiv(N, TILE_N)
    y2d = y.reshape(N, H)

    ffn_cost = pl.CostEstimate(
        flops=int(4 * N * H * inter),
        transcendentals=int(N * inter),
        bytes_accessed=int(8 * N * H + 2 * 2 * H * inter + 4 * (inter + 3 * H)),
    )
    out2d = pl.pallas_call(
        functools.partial(_ffn_ln2_kernel, eps=eps),
        out_shape=jax.ShapeDtypeStruct((N, H), jnp.float32),
        grid=(n_tiles,),
        in_specs=[
            pl.BlockSpec((TILE_N, H), lambda i: (i, 0)),
            pl.BlockSpec((H, inter), lambda i: (0, 0)),   # weights stay VMEM-resident
            pl.BlockSpec((1, inter), lambda i: (0, 0)),
            pl.BlockSpec((inter, H), lambda i: (0, 0)),
            pl.BlockSpec((1, H), lambda i: (0, 0)),
            pl.BlockSpec((1, H), lambda i: (0, 0)),
            pl.BlockSpec((1, H), lambda i: (0, 0)),
        ],
        out_specs=pl.BlockSpec((TILE_N, H), lambda i: (i, 0)),
        compiler_params=pltpu.CompilerParams(
            dimension_semantics=("parallel",),
            vmem_limit_bytes=vmem_limit),
        cost_estimate=ffn_cost,
    )(y2d, w1, b1, w2, b2, g2, beta2)

    return out2d.reshape(B, S, H)


def init_params(key, h_dim, n_heads):
    """Deterministic synthetic params matching the PyTorch module's shapes.

    Weights are stored transposed vs. PyTorch ((in, out)) so kernels compute
    x @ W + b directly.  in_proj of nn.MultiheadAttention is the fused (H, 3H).
    """
    H = h_dim
    inter = 4 * H
    ks = jax.random.split(key, 12)
    b_h = 1.0 / math.sqrt(H)
    b_i = 1.0 / math.sqrt(inter)
    u = jax.random.uniform
    return dict(
        n_heads=n_heads,
        wqkv=u(ks[0], (H, 3 * H), jnp.float32, -b_h, b_h),
        bqkv=u(ks[1], (1, 3 * H), jnp.float32, -b_h, b_h),
        wo=u(ks[2], (H, H), jnp.float32, -b_h, b_h),
        bo=u(ks[3], (1, H), jnp.float32, -b_h, b_h),
        ln1_g=1.0 + 0.1 * jax.random.normal(ks[4], (1, H), jnp.float32),
        ln1_b=0.1 * jax.random.normal(ks[5], (1, H), jnp.float32),
        w1=u(ks[6], (H, inter), jnp.float32, -b_h, b_h),
        b1=u(ks[7], (1, inter), jnp.float32, -b_h, b_h),
        w2=u(ks[8], (inter, H), jnp.float32, -b_i, b_i),
        b2=u(ks[9], (1, H), jnp.float32, -b_i, b_i),
        ln2_g=1.0 + 0.1 * jax.random.normal(ks[10], (1, H), jnp.float32),
        ln2_b=0.1 * jax.random.normal(ks[11], (1, H), jnp.float32),
    )


def _layer_norm_ref(x, g, b, eps=1e-5):
    mu = jnp.mean(x, axis=-1, keepdims=True)
    var = jnp.mean((x - mu) ** 2, axis=-1, keepdims=True)
    return (x - mu) * jax.lax.rsqrt(var + eps) * g + b


def reference_forward(x, params):
    """Plain-JAX fp32 reference of the PyTorch attention_block (eval mode)."""
    B, S, H = x.shape
    nh = params["n_heads"]
    dh = H // nh

    qkv = x @ params["wqkv"] + params["bqkv"]
    q, k, v = jnp.split(qkv, 3, axis=-1)

    def split_heads(t):
        return t.reshape(B, S, nh, dh).transpose(0, 2, 1, 3)

    q, k, v = map(split_heads, (q, k, v))
    s = jnp.einsum("bhqd,bhkd->bhqk", q, k) / math.sqrt(dh)
    p = jax.nn.softmax(s, axis=-1)
    a = jnp.einsum("bhqk,bhkd->bhqd", p, v).transpose(0, 2, 1, 3).reshape(B, S, H)
    mh = a @ params["wo"] + params["bo"]

    y = _layer_norm_ref(x + mh, params["ln1_g"], params["ln1_b"])

    h = y @ params["w1"] + params["b1"]
    h = 0.5 * h * (1.0 + jax.lax.erf(h * _INV_SQRT2))        # exact GELU
    f = h @ params["w2"] + params["b2"]

    return _layer_norm_ref(y + f, params["ln2_g"], params["ln2_b"])


# TODO(synk): train-mode nn.Dropout (stochastic masking) is not implemented;
# all dropout layers are treated as identity (eval / inference semantics).

if __name__ == "__main__":
    key = jax.random.PRNGKey(0)
    k_x, k_p = jax.random.split(key)

    B, S, H, n_heads = 2, 8, 32, 4
    x = jax.random.normal(k_x, (B, S, H), jnp.float32)
    params = init_params(k_p, H, n_heads)

    out = jax.block_until_ready(attention_block_forward(x, params))

    with jax.default_matmul_precision("float32"):
        ref = jax.block_until_ready(reference_forward(x, params))

    assert out.shape == (B, S, H), out.shape
    max_err = float(jnp.max(jnp.abs(out - ref)))
    # bf16 matmul operands + approx reciprocal / erf vs. the fp32 reference.
    assert max_err < 5e-2, f"mismatch vs reference: max abs err = {max_err}"

    print("KERNEL_OK")
</pallas_src>

<mosaic_0001>
module attributes {stable_mosaic.version = 11 : i64} {
  func.func @_mha_ln1_kernel(%arg0: i32, %arg1: memref<2x8x32xf32, #tpu.memory_space<vmem>>, %arg2: memref<32x96xbf16, #tpu.memory_space<vmem>>, %arg3: memref<1x96xf32, #tpu.memory_space<vmem>>, %arg4: memref<32x32xbf16, #tpu.memory_space<vmem>>, %arg5: memref<1x32xf32, #tpu.memory_space<vmem>>, %arg6: memref<1x32xf32, #tpu.memory_space<vmem>>, %arg7: memref<1x32xf32, #tpu.memory_space<vmem>>, %arg8: memref<2x8x32xf32, #tpu.memory_space<vmem>>) attributes {dimension_semantics = [#tpu.dimension_semantics<parallel>], iteration_bounds = array<i64: 1>, scalar_prefetch = 0 : i64, scratch_operands = 0 : i64, tpu.core_type = #tpu.core_type<tc>, window_params = [{transform_indices = @transform_0, window_bounds = array<i64: 2, 8, 32>}, {pipeline_mode = #tpu.pipeline_mode<synchronous>, transform_indices = @transform_1, window_bounds = array<i64: 32, 96>}, {pipeline_mode = #tpu.pipeline_mode<synchronous>, transform_indices = @transform_2, window_bounds = array<i64: 1, 96>}, {pipeline_mode = #tpu.pipeline_mode<synchronous>, transform_indices = @transform_3, window_bounds = array<i64: 32, 32>}, {pipeline_mode = #tpu.pipeline_mode<synchronous>, transform_indices = @transform_4, window_bounds = array<i64: 1, 32>}, {pipeline_mode = #tpu.pipeline_mode<synchronous>, transform_indices = @transform_5, window_bounds = array<i64: 1, 32>}, {pipeline_mode = #tpu.pipeline_mode<synchronous>, transform_indices = @transform_6, window_bounds = array<i64: 1, 32>}, {transform_indices = @transform_7, window_bounds = array<i64: 2, 8, 32>}]} {
    %c0 = arith.constant 0 : index
    %c0_0 = arith.constant 0 : index
    %c0_1 = arith.constant 0 : index
    %0 = vector.load %arg1[%c0, %c0_0, %c0_1] : memref<2x8x32xf32, #tpu.memory_space<vmem>>, vector<2x8x32xf32>
    %1 = vector.shape_cast %0 : vector<2x8x32xf32> to vector<16x32xf32>
    %2 = arith.truncf %1 : vector<16x32xf32> to vector<16x32xbf16>
    %c0_2 = arith.constant 0 : index
    %c0_3 = arith.constant 0 : index
    %3 = vector.load %arg2[%c0_2, %c0_3] : memref<32x96xbf16, #tpu.memory_space<vmem>>, vector<32x96xbf16>
    %cst = arith.constant dense<0.000000e+00> : vector<16x96xf32>
    %4 = tpu.matmul %2, %3, %cst {dimension_numbers = #tpu.dot_dimension_numbers<[1], [0], [0], [1], [0, 0, 1, 1], [], []>} : vector<16x32xbf16>, vector<32x96xbf16>, vector<16x96xf32> -> vector<16x96xf32>
    %c0_4 = arith.constant 0 : index
    %c0_5 = arith.constant 0 : index
    %5 = vector.load %arg3[%c0_4, %c0_5] : memref<1x96xf32, #tpu.memory_space<vmem>>, vector<1x96xf32>
    %6 = vector.broadcast %5 : vector<1x96xf32> to vector<16x96xf32>
    %7 = arith.addf %4, %6 : vector<16x96xf32>
    %c0_6 = arith.constant 0 : index
    %c0_7 = arith.constant 0 : index
    %8 = vector.load %arg4[%c0_6, %c0_7] : memref<32x32xbf16, #tpu.memory_space<vmem>>, vector<32x32xbf16>
    %c0_8 = arith.constant 0 : index
    %c0_9 = arith.constant 0 : index
    %9 = vector.load %arg5[%c0_8, %c0_9] : memref<1x32xf32, #tpu.memory_space<vmem>>, vector<1x32xf32>
    %c0_10 = arith.constant 0 : index
    %c0_11 = arith.constant 0 : index
    %10 = vector.load %arg6[%c0_10, %c0_11] : memref<1x32xf32, #tpu.memory_space<vmem>>, vector<1x32xf32>
    %c0_12 = arith.constant 0 : index
    %c0_13 = arith.constant 0 : index
    %11 = vector.load %arg7[%c0_12, %c0_13] : memref<1x32xf32, #tpu.memory_space<vmem>>, vector<1x32xf32>
    %cst_14 = arith.constant 0.000000e+00 : f32
    %12 = vector.broadcast %cst_14 : f32 to vector<8x32xf32>
    %13 = vector.extract_strided_slice %7 {offsets = [0, 0], sizes = [8, 8], strides = [1, 1]} : vector<16x96xf32> to vector<8x8xf32>
    %cst_15 = arith.constant 0.353553385 : f32
    %14 = vector.broadcast %cst_15 : f32 to vector<8x8xf32>
    %15 = arith.mulf %13, %14 : vector<8x8xf32>
    %16 = arith.truncf %15 : vector<8x8xf32> to vector<8x8xbf16>
    %17 = vector.extract_strided_slice %7 {offsets = [0, 32], sizes = [8, 8], strides = [1, 1]} : vector<16x96xf32> to vector<8x8xf32>
    %18 = arith.truncf %17 : vector<8x8xf32> to vector<8x8xbf16>
    %19 = vector.extract_strided_slice %7 {offsets = [0, 64], sizes = [8, 8], strides = [1, 1]} : vector<16x96xf32> to vector<8x8xf32>
    %20 = arith.truncf %19 : vector<8x8xf32> to vector<8x8xbf16>
    %cst_16 = arith.constant dense<0.000000e+00> : vector<8x8xf32>
    %21 = tpu.matmul %16, %18, %cst_16 {dimension_numbers = #tpu.dot_dimension_numbers<[1], [1], [0], [0], [0, 0, 1, 0], [], []>} : vector<8x8xbf16>, vector<8x8xbf16>, vector<8x8xf32> -> vector<8x8xf32>
    %cst_17 = arith.constant dense<0xFF800000> : vector<8xf32>
    %22 = vector.multi_reduction <maximumf>, %21, %cst_17 [1] : vector<8x8xf32> to vector<8xf32>
    %23 = vector.shape_cast %22 : vector<8xf32> to vector<8x1xf32>
    %24 = vector.broadcast %23 : vector<8x1xf32> to vector<8x8xf32>
    %25 = arith.subf %21, %24 : vector<8x8xf32>
    %26 = math.exp %25 : vector<8x8xf32>
    %cst_18 = arith.constant dense<0.000000e+00> : vector<8xf32>
    %27 = vector.multi_reduction <add>, %26, %cst_18 [1] : vector<8x8xf32> to vector<8xf32>
    %28 = vector.shape_cast %27 : vector<8xf32> to vector<8x1xf32>
    %29 = tpu.reciprocal %28 {approx = true} : vector<8x1xf32> -> vector<8x1xf32>
    %30 = vector.broadcast %29 : vector<8x1xf32> to vector<8x8xf32>
    %31 = arith.mulf %26, %30 : vector<8x8xf32>
    %32 = arith.truncf %31 : vector<8x8xf32> to vector<8x8xbf16>
    %cst_19 = arith.constant dense<0.000000e+00> : vector<8x8xf32>
    %33 = tpu.matmul %32, %20, %cst_19 {dimension_numbers = #tpu.dot_dimension_numbers<[1], [0], [0], [1], [0, 0, 1, 1], [], []>} : vector<8x8xbf16>, vector<8x8xbf16>, vector<8x8xf32> -> vector<8x8xf32>
    %34 = arith.truncf %33 : vector<8x8xf32> to vector<8x8xbf16>
    %35 = vector.extract_strided_slice %8 {offsets = [0, 0], sizes = [8, 32], strides = [1, 1]} : vector<32x32xbf16> to vector<8x32xbf16>
    %cst_20 = arith.constant dense<0.000000e+00> : vector<8x32xf32>
    %36 = tpu.matmul %34, %35, %cst_20 {dimension_numbers = #tpu.dot_dimension_numbers<[1], [0], [0], [1], [0, 0, 1, 1], [], []>} : vector<8x8xbf16>, vector<8x32xbf16>, vector<8x32xf32> -> vector<8x32xf32>
    %37 = arith.addf %12, %36 : vector<8x32xf32>
    %38 = vector.extract_strided_slice %7 {offsets = [0, 8], sizes = [8, 8], strides = [1, 1]} : vector<16x96xf32> to vector<8x8xf32>
    %cst_21 = arith.constant 0.353553385 : f32
    %39 = vector.broadcast %cst_21 : f32 to vector<8x8xf32>
    %40 = arith.mulf %38, %39 : vector<8x8xf32>
    %41 = arith.truncf %40 : vector<8x8xf32> to vector<8x8xbf16>
    %42 = vector.extract_strided_slice %7 {offsets = [0, 40], sizes = [8, 8], strides = [1, 1]} : vector<16x96xf32> to vector<8x8xf32>
    %43 = arith.truncf %42 : vector<8x8xf32> to vector<8x8xbf16>
    %44 = vector.extract_strided_slice %7 {offsets = [0, 72], sizes = [8, 8], strides = [1, 1]} : vector<16x96xf32> to vector<8x8xf32>
    %45 = arith.truncf %44 : vector<8x8xf32> to vector<8x8xbf16>
    %cst_22 = arith.constant dense<0.000000e+00> : vector<8x8xf32>
    %46 = tpu.matmul %41, %43, %cst_22 {dimension_numbers = #tpu.dot_dimension_numbers<[1], [1], [0], [0], [0, 0, 1, 0], [], []>} : vector<8x8xbf16>, vector<8x8xbf16>, vector<8x8xf32> -> vector<8x8xf32>
    %cst_23 = arith.constant dense<0xFF800000> : vector<8xf32>
    %47 = vector.multi_reduction <maximumf>, %46, %cst_23 [1] : vector<8x8xf32> to vector<8xf32>
    %48 = vector.shape_cast %47 : vector<8xf32> to vector<8x1xf32>
    %49 = vector.broadcast %48 : vector<8x1xf32> to vector<8x8xf32>
    %50 = arith.subf %46, %49 : vector<8x8xf32>
    %51 = math.exp %50 : vector<8x8xf32>
    %cst_24 = arith.constant dense<0.000000e+00> : vector<8xf32>
    %52 = vector.multi_reduction <add>, %51, %cst_24 [1] : vector<8x8xf32> to vector<8xf32>
    %53 = vector.shape_cast %52 : vector<8xf32> to vector<8x1xf32>
    %54 = tpu.reciprocal %53 {approx = true} : vector<8x1xf32> -> vector<8x1xf32>
    %55 = vector.broadcast %54 : vector<8x1xf32> to vector<8x8xf32>
    %56 = arith.mulf %51, %55 : vector<8x8xf32>
    %57 = arith.truncf %56 : vector<8x8xf32> to vector<8x8xbf16>
    %cst_25 = arith.constant dense<0.000000e+00> : vector<8x8xf32>
    %58 = tpu.matmul %57, %45, %cst_25 {dimension_numbers = #tpu.dot_dimension_numbers<[1], [0], [0], [1], [0, 0, 1, 1], [], []>} : vector<8x8xbf16>, vector<8x8xbf16>, vector<8x8xf32> -> vector<8x8xf32>
    %59 = arith.truncf %58 : vector<8x8xf32> to vector<8x8xbf16>
    %60 = vector.extract_strided_slice %8 {offsets = [8, 0], sizes = [8, 32], strides = [1, 1]} : vector<32x32xbf16> to vector<8x32xbf16>
    %cst_26 = arith.constant dense<0.000000e+00> : vector<8x32xf32>
    %61 = tpu.matmul %59, %60, %cst_26 {dimension_numbers = #tpu.dot_dimension_numbers<[1], [0], [0], [1], [0, 0, 1, 1], [], []>} : vector<8x8xbf16>, vector<8x32xbf16>, vector<8x32xf32> -> vector<8x32xf32>
    %62 = arith.addf %37, %61 : vector<8x32xf32>
    %63 = vector.extract_strided_slice %7 {offsets = [0, 16], sizes = [8, 8], strides = [1, 1]} : vector<16x96xf32> to vector<8x8xf32>
    %cst_27 = arith.constant 0.353553385 : f32
    %64 = vector.broadcast %cst_27 : f32 to vector<8x8xf32>
    %65 = arith.mulf %63, %64 : vector<8x8xf32>
    %66 = arith.truncf %65 : vector<8x8xf32> to vector<8x8xbf16>
    %67 = vector.extract_strided_slice %7 {offsets = [0, 48], sizes = [8, 8], strides = [1, 1]} : vector<16x96xf32> to vector<8x8xf32>
    %68 = arith.truncf %67 : vector<8x8xf32> to vector<8x8xbf16>
    %69 = vector.extract_strided_slice %7 {offsets = [0, 80], sizes = [8, 8], strides = [1, 1]} : vector<16x96xf32> to vector<8x8xf32>
    %70 = arith.truncf %69 : vector<8x8xf32> to vector<8x8xbf16>
    %cst_28 = arith.constant dense<0.000000e+00> : vector<8x8xf32>
    %71 = tpu.matmul %66, %68, %cst_28 {dimension_numbers = #tpu.dot_dimension_numbers<[1], [1], [0], [0], [0, 0, 1, 0], [], []>} : vector<8x8xbf16>, vector<8x8xbf16>, vector<8x8xf32> -> vector<8x8xf32>
    %cst_29 = arith.constant dense<0xFF800000> : vector<8xf32>
    %72 = vector.multi_reduction <maximumf>, %71, %cst_29 [1] : vector<8x8xf32> to vector<8xf32>
    %73 = vector.shape_cast %72 : vector<8xf32> to vector<8x1xf32>
    %74 = vector.broadcast %73 : vector<8x1xf32> to vector<8x8xf32>
    %75 = arith.subf %71, %74 : vector<8x8xf32>
    %76 = math.exp %75 : vector<8x8xf32>
    %cst_30 = arith.constant dense<0.000000e+00> : vector<8xf32>
    %77 = vector.multi_reduction <add>, %76, %cst_30 [1] : vector<8x8xf32> to vector<8xf32>
    %78 = vector.shape_cast %77 : vector<8xf32> to vector<8x1xf32>
    %79 = tpu.reciprocal %78 {approx = true} : vector<8x1xf32> -> vector<8x1xf32>
    %80 = vector.broadcast %79 : vector<8x1xf32> to vector<8x8xf32>
    %81 = arith.mulf %76, %80 : vector<8x8xf32>
    %82 = arith.truncf %81 : vector<8x8xf32> to vector<8x8xbf16>
    %cst_31 = arith.constant dense<0.000000e+00> : vector<8x8xf32>
    %83 = tpu.matmul %82, %70, %cst_31 {dimension_numbers = #tpu.dot_dimension_numbers<[1], [0], [0], [1], [0, 0, 1, 1], [], []>} : vector<8x8xbf16>, vector<8x8xbf16>, vector<8x8xf32> -> vector<8x8xf32>
    %84 = arith.truncf %83 : vector<8x8xf32> to vector<8x8xbf16>
    %85 = vector.extract_strided_slice %8 {offsets = [16, 0], sizes = [8, 32], strides = [1, 1]} : vector<32x32xbf16> to vector<8x32xbf16>
    %cst_32 = arith.constant dense<0.000000e+00> : vector<8x32xf32>
    %86 = tpu.matmul %84, %85, %cst_32 {dimension_numbers = #tpu.dot_dimension_numbers<[1], [0], [0], [1], [0, 0, 1, 1], [], []>} : vector<8x8xbf16>, vector<8x32xbf16>, vector<8x32xf32> -> vector<8x32xf32>
    %87 = arith.addf %62, %86 : vector<8x32xf32>
    %88 = vector.extract_strided_slice %7 {offsets = [0, 24], sizes = [8, 8], strides = [1, 1]} : vector<16x96xf32> to vector<8x8xf32>
    %cst_33 = arith.constant 0.353553385 : f32
    %89 = vector.broadcast %cst_33 : f32 to vector<8x8xf32>
    %90 = arith.mulf %88, %89 : vector<8x8xf32>
    %91 = arith.truncf %90 : vector<8x8xf32> to vector<8x8xbf16>
    %92 = vector.extract_strided_slice %7 {offsets = [0, 56], sizes = [8, 8], strides = [1, 1]} : vector<16x96xf32> to vector<8x8xf32>
    %93 = arith.truncf %92 : vector<8x8xf32> to vector<8x8xbf16>
    %94 = vector.extract_strided_slice %7 {offsets = [0, 88], sizes = [8, 8], strides = [1, 1]} : vector<16x96xf32> to vector<8x8xf32>
    %95 = arith.truncf %94 : vector<8x8xf32> to vector<8x8xbf16>
    %cst_34 = arith.constant dense<0.000000e+00> : vector<8x8xf32>
    %96 = tpu.matmul %91, %93, %cst_34 {dimension_numbers = #tpu.dot_dimension_numbers<[1], [1], [0], [0], [0, 0, 1, 0], [], []>} : vector<8x8xbf16>, vector<8x8xbf16>, vector<8x8xf32> -> vector<8x8xf32>
    %cst_35 = arith.constant dense<0xFF800000> : vector<8xf32>
    %97 = vector.multi_reduction <maximumf>, %96, %cst_35 [1] : vector<8x8xf32> to vector<8xf32>
    %98 = vector.shape_cast %97 : vector<8xf32> to vector<8x1xf32>
    %99 = vector.broadcast %98 : vector<8x1xf32> to vector<8x8xf32>
    %100 = arith.subf %96, %99 : vector<8x8xf32>
    %101 = math.exp %100 : vector<8x8xf32>
    %cst_36 = arith.constant dense<0.000000e+00> : vector<8xf32>
    %102 = vector.multi_reduction <add>, %101, %cst_36 [1] : vector<8x8xf32> to vector<8xf32>
    %103 = vector.shape_cast %102 : vector<8xf32> to vector<8x1xf32>
    %104 = tpu.reciprocal %103 {approx = true} : vector<8x1xf32> -> vector<8x1xf32>
    %105 = vector.broadcast %104 : vector<8x1xf32> to vector<8x8xf32>
    %106 = arith.mulf %101, %105 : vector<8x8xf32>
    %107 = arith.truncf %106 : vector<8x8xf32> to vector<8x8xbf16>
    %cst_37 = arith.constant dense<0.000000e+00> : vector<8x8xf32>
    %108 = tpu.matmul %107, %95, %cst_37 {dimension_numbers = #tpu.dot_dimension_numbers<[1], [0], [0], [1], [0, 0, 1, 1], [], []>} : vector<8x8xbf16>, vector<8x8xbf16>, vector<8x8xf32> -> vector<8x8xf32>
    %109 = arith.truncf %108 : vector<8x8xf32> to vector<8x8xbf16>
    %110 = vector.extract_strided_slice %8 {offsets = [24, 0], sizes = [8, 32], strides = [1, 1]} : vector<32x32xbf16> to vector<8x32xbf16>
    %cst_38 = arith.constant dense<0.000000e+00> : vector<8x32xf32>
    %111 = tpu.matmul %109, %110, %cst_38 {dimension_numbers = #tpu.dot_dimension_numbers<[1], [0], [0], [1], [0, 0, 1, 1], [], []>} : vector<8x8xbf16>, vector<8x32xbf16>, vector<8x32xf32> -> vector<8x32xf32>
    %112 = arith.addf %87, %111 : vector<8x32xf32>
    %113 = vector.broadcast %9 : vector<1x32xf32> to vector<8x32xf32>
    %114 = arith.addf %112, %113 : vector<8x32xf32>
    %115 = vector.extract_strided_slice %0 {offsets = [0, 0, 0], sizes = [1, 8, 32], strides = [1, 1, 1]} : vector<2x8x32xf32> to vector<1x8x32xf32>
    %116 = vector.shape_cast %115 : vector<1x8x32xf32> to vector<8x32xf32>
    %117 = arith.addf %116, %114 : vector<8x32xf32>
    %cst_39 = arith.constant dense<0.000000e+00> : vector<8xf32>
    %118 = vector.multi_reduction <add>, %117, %cst_39 [1] : vector<8x32xf32> to vector<8xf32>
    %119 = vector.shape_cast %118 : vector<8xf32> to vector<8x1xf32>
    %cst_40 = arith.constant 3.200000e+01 : f32
    %120 = vector.broadcast %cst_40 : f32 to vector<8x1xf32>
    %121 = arith.divf %119, %120 : vector<8x1xf32>
    %122 = vector.broadcast %121 : vector<8x1xf32> to vector<8x32xf32>
    %123 = arith.subf %117, %122 : vector<8x32xf32>
    %124 = arith.mulf %123, %123 : vector<8x32xf32>
    %cst_41 = arith.constant dense<0.000000e+00> : vector<8xf32>
    %125 = vector.multi_reduction <add>, %124, %cst_41 [1] : vector<8x32xf32> to vector<8xf32>
    %126 = vector.shape_cast %125 : vector<8xf32> to vector<8x1xf32>
    %cst_42 = arith.constant 3.200000e+01 : f32
    %127 = vector.broadcast %cst_42 : f32 to vector<8x1xf32>
    %128 = arith.divf %126, %127 : vector<8x1xf32>
    %cst_43 = arith.constant 9.99999974E-6 : f32
    %129 = vector.broadcast %cst_43 : f32 to vector<8x1xf32>
    %130 = arith.addf %128, %129 : vector<8x1xf32>
    %131 = math.rsqrt %130 : vector<8x1xf32>
    %132 = vector.broadcast %131 : vector<8x1xf32> to vector<8x32xf32>
    %133 = arith.mulf %123, %132 : vector<8x32xf32>
    %134 = vector.broadcast %10 : vector<1x32xf32> to vector<8x32xf32>
    %135 = arith.mulf %133, %134 : vector<8x32xf32>
    %136 = vector.broadcast %11 : vector<1x32xf32> to vector<8x32xf32>
    %137 = arith.addf %135, %136 : vector<8x32xf32>
    %c0_44 = arith.constant 0 : index
    %c0_45 = arith.constant 0 : index
    %c0_46 = arith.constant 0 : index
    %138 = vector.load %arg8[%c0_44, %c0_45, %c0_46] : memref<2x8x32xf32, #tpu.memory_space<vmem>>, vector<1x8x32xf32>
    %139 = vector.shape_cast %138 : vector<1x8x32xf32> to vector<8x32xf32>
    %140 = vector.shape_cast %137 : vector<8x32xf32> to vector<1x8x32xf32>
    tpu.vector_store %arg8[%c0_44, %c0_45, %c0_46], %140 {strides = array<i32>} : memref<2x8x32xf32, #tpu.memory_space<vmem>>, vector<1x8x32xf32>,
    %cst_47 = arith.constant 0.000000e+00 : f32
    %141 = vector.broadcast %cst_47 : f32 to vector<8x32xf32>
    %142 = vector.extract_strided_slice %7 {offsets = [8, 0], sizes = [8, 8], strides = [1, 1]} : vector<16x96xf32> to vector<8x8xf32>
    %cst_48 = arith.constant 0.353553385 : f32
    %143 = vector.broadcast %cst_48 : f32 to vector<8x8xf32>
    %144 = arith.mulf %142, %143 : vector<8x8xf32>
    %145 = arith.truncf %144 : vector<8x8xf32> to vector<8x8xbf16>
    %146 = vector.extract_strided_slice %7 {offsets = [8, 32], sizes = [8, 8], strides = [1, 1]} : vector<16x96xf32> to vector<8x8xf32>
    %147 = arith.truncf %146 : vector<8x8xf32> to vector<8x8xbf16>
    %148 = vector.extract_strided_slice %7 {offsets = [8, 64], sizes = [8, 8], strides = [1, 1]} : vector<16x96xf32> to vector<8x8xf32>
    %149 = arith.truncf %148 : vector<8x8xf32> to vector<8x8xbf16>
    %cst_49 = arith.constant dense<0.000000e+00> : vector<8x8xf32>
    %150 = tpu.matmul %145, %147, %cst_49 {dimension_numbers = #tpu.dot_dimension_numbers<[1], [1], [0], [0], [0, 0, 1, 0], [], []>} : vector<8x8xbf16>, vector<8x8xbf16>, vector<8x8xf32> -> vector<8x8xf32>
    %cst_50 = arith.constant dense<0xFF800000> : vector<8xf32>
    %151 = vector.multi_reduction <maximumf>, %150, %cst_50 [1] : vector<8x8xf32> to vector<8xf32>
    %152 = vector.shape_cast %151 : vector<8xf32> to vector<8x1xf32>
    %153 = vector.broadcast %152 : vector<8x1xf32> to vector<8x8xf32>
    %154 = arith.subf %150, %153 : vector<8x8xf32>
    %155 = math.exp %154 : vector<8x8xf32>
    %cst_51 = arith.constant dense<0.000000e+00> : vector<8xf32>
    %156 = vector.multi_reduction <add>, %155, %cst_51 [1] : vector<8x8xf32> to vector<8xf32>
    %157 = vector.shape_cast %156 : vector<8xf32> to vector<8x1xf32>
    %158 = tpu.reciprocal %157 {approx = true} : vector<8x1xf32> -> vector<8x1xf32>
    %159 = vector.broadcast %158 : vector<8x1xf32> to vector<8x8xf32>
    %160 = arith.mulf %155, %159 : vector<8x8xf32>
    %161 = arith.truncf %160 : vector<8x8xf32> to vector<8x8xbf16>
    %cst_52 = arith.constant dense<0.000000e+00> : vector<8x8xf32>
    %162 = tpu.matmul %161, %149, %cst_52 {dimension_numbers = #tpu.dot_dimension_numbers<[1], [0], [0], [1], [0, 0, 1, 1], [], []>} : vector<8x8xbf16>, vector<8x8xbf16>, vector<8x8xf32> -> vector<8x8xf32>
    %163 = arith.truncf %162 : vector<8x8xf32> to vector<8x8xbf16>
    %164 = vector.extract_strided_slice %8 {offsets = [0, 0], sizes = [8, 32], strides = [1, 1]} : vector<32x32xbf16> to vector<8x32xbf16>
    %cst_53 = arith.constant dense<0.000000e+00> : vector<8x32xf32>
    %165 = tpu.matmul %163, %164, %cst_53 {dimension_numbers = #tpu.dot_dimension_numbers<[1], [0], [0], [1], [0, 0, 1, 1], [], []>} : vector<8x8xbf16>, vector<8x32xbf16>, vector<8x32xf32> -> vector<8x32xf32>
    %166 = arith.addf %141, %165 : vector<8x32xf32>
    %167 = vector.extract_strided_slice %7 {offsets = [8, 8], sizes = [8, 8], strides = [1, 1]} : vector<16x96xf32> to vector<8x8xf32>
    %cst_54 = arith.constant 0.353553385 : f32
    %168 = vector.broadcast %cst_54 : f32 to vector<8x8xf32>
    %169 = arith.mulf %167, %168 : vector<8x8xf32>
    %170 = arith.truncf %169 : vector<8x8xf32> to vector<8x8xbf16>
    %171 = vector.extract_strided_slice %7 {offsets = [8, 40], sizes = [8, 8], strides = [1, 1]} : vector<16x96xf32> to vector<8x8xf32>
    %172 = arith.truncf %171 : vector<8x8xf32> to vector<8x8xbf16>
    %173 = vector.extract_strided_slice %7 {offsets = [8, 72], sizes = [8, 8], strides = [1, 1]} : vector<16x96xf32> to vector<8x8xf32>
    %174 = arith.truncf %173 : vector<8x8xf32> to vector<8x8xbf16>
    %cst_55 = arith.constant dense<0.000000e+00> : vector<8x8xf32>
    %175 = tpu.matmul %170, %172, %cst_55 {dimension_numbers = #tpu.dot_dimension_numbers<[1], [1], [0], [0], [0, 0, 1, 0], [], []>} : vector<8x8xbf16>, vector<8x8xbf16>, vector<8x8xf32> -> vector<8x8xf32>
    %cst_56 = arith.constant dense<0xFF800000> : vector<8xf32>
    %176 = vector.multi_reduction <maximumf>, %175, %cst_56 [1] : vector<8x8xf32> to vector<8xf32>
    %177 = vector.shape_cast %176 : vector<8xf32> to vector<8x1xf32>
    %178 = vector.broadcast %177 : vector<8x1xf32> to vector<8x8xf32>
    %179 = arith.subf %175, %178 : vector<8x8xf32>
    %180 = math.exp %179 : vector<8x8xf32>
    %cst_57 = arith.constant dense<0.000000e+00> : vector<8xf32>
    %181 = vector.multi_reduction <add>, %180, %cst_57 [1] : vector<8x8xf32> to vector<8xf32>
    %182 = vector.shape_cast %181 : vector<8xf32> to vector<8x1xf32>
    %183 = tpu.reciprocal %182 {approx = true} : vector<8x1xf32> -> vector<8x1xf32>
    %184 = vector.broadcast %183 : vector<8x1xf32> to vector<8x8xf32>
    %185 = arith.mulf %180, %184 : vector<8x8xf32>
    %186 = arith.truncf %185 : vector<8x8xf32> to vector<8x8xbf16>
    %cst_58 = arith.constant dense<0.000000e+00> : vector<8x8xf32>
    %187 = tpu.matmul %186, %174, %cst_58 {dimension_numbers = #tpu.dot_dimension_numbers<[1], [0], [0], [1], [0, 0, 1, 1], [], []>} : vector<8x8xbf16>, vector<8x8xbf16>, vector<8x8xf32> -> vector<8x8xf32>
    %188 = arith.truncf %187 : vector<8x8xf32> to vector<8x8xbf16>
    %189 = vector.extract_strided_slice %8 {offsets = [8, 0], sizes = [8, 32], strides = [1, 1]} : vector<32x32xbf16> to vector<8x32xbf16>
    %cst_59 = arith.constant dense<0.000000e+00> : vector<8x32xf32>
    %190 = tpu.matmul %188, %189, %cst_59 {dimension_numbers = #tpu.dot_dimension_numbers<[1], [0], [0], [1], [0, 0, 1, 1], [], []>} : vector<8x8xbf16>, vector<8x32xbf16>, vector<8x32xf32> -> vector<8x32xf32>
    %191 = arith.addf %166, %190 : vector<8x32xf32>
    %192 = vector.extract_strided_slice %7 {offsets = [8, 16], sizes = [8, 8], strides = [1, 1]} : vector<16x96xf32> to vector<8x8xf32>
    %cst_60 = arith.constant 0.353553385 : f32
    %193 = vector.broadcast %cst_60 : f32 to vector<8x8xf32>
    %194 = arith.mulf %192, %193 : vector<8x8xf32>
    %195 = arith.truncf %194 : vector<8x8xf32> to vector<8x8xbf16>
    %196 = vector.extract_strided_slice %7 {offsets = [8, 48], sizes = [8, 8], strides = [1, 1]} : vector<16x96xf32> to vector<8x8xf32>
    %197 = arith.truncf %196 : vector<8x8xf32> to vector<8x8xbf16>
    %198 = vector.extract_strided_slice %7 {offsets = [8, 80], sizes = [8, 8], strides = [1, 1]} : vector<16x96xf32> to vector<8x8xf32>
    %199 = arith.truncf %198 : vector<8x8xf32> to vector<8x8xbf16>
    %cst_61 = arith.constant dense<0.000000e+00> : vector<8x8xf32>
    %200 = tpu.matmul %195, %197, %cst_61 {dimension_numbers = #tpu.dot_dimension_numbers<[1], [1], [0], [0], [0, 0, 1, 0], [], []>} : vector<8x8xbf16>, vector<8x8xbf16>, vector<8x8xf32> -> vector<8x8xf32>
    %cst_62 = arith.constant dense<0xFF800000> : vector<8xf32>
    %201 = vector.multi_reduction <maximumf>, %200, %cst_62 [1] : vector<8x8xf32> to vector<8xf32>
    %202 = vector.shape_cast %201 : vector<8xf32> to vector<8x1xf32>
    %203 = vector.broadcast %202 : vector<8x1xf32> to vector<8x8xf32>
    %204 = arith.subf %200, %203 : vector<8x8xf32>
    %205 = math.exp %204 : vector<8x8xf32>
    %cst_63 = arith.constant dense<0.000000e+00> : vector<8xf32>
    %206 = vector.multi_reduction <add>, %205, %cst_63 [1] : vector<8x8xf32> to vector<8xf32>
    %207 = vector.shape_cast %206 : vector<8xf32> to vector<8x1xf32>
    %208 = tpu.reciprocal %207 {approx = true} : vector<8x1xf32> -> vector<8x1xf32>
    %209 = vector.broadcast %208 : vector<8x1xf32> to vector<8x8xf32>
    %210 = arith.mulf %205, %209 : vector<8x8xf32>
    %211 = arith.truncf %210 : vector<8x8xf32> to vector<8x8xbf16>
    %cst_64 = arith.constant dense<0.000000e+00> : vector<8x8xf32>
    %212 = tpu.matmul %211, %199, %cst_64 {dimension_numbers = #tpu.dot_dimension_numbers<[1], [0], [0], [1], [0, 0, 1, 1], [], []>} : vector<8x8xbf16>, vector<8x8xbf16>, vector<8x8xf32> -> vector<8x8xf32>
    %213 = arith.truncf %212 : vector<8x8xf32> to vector<8x8xbf16>
    %214 = vector.extract_strided_slice %8 {offsets = [16, 0], sizes = [8, 32], strides = [1, 1]} : vector<32x32xbf16> to vector<8x32xbf16>
    %cst_65 = arith.constant dense<0.000000e+00> : vector<8x32xf32>
    %215 = tpu.matmul %213, %214, %cst_65 {dimension_numbers = #tpu.dot_dimension_numbers<[1], [0], [0], [1], [0, 0, 1, 1], [], []>} : vector<8x8xbf16>, vector<8x32xbf16>, vector<8x32xf32> -> vector<8x32xf32>
    %216 = arith.addf %191, %215 : vector<8x32xf32>
    %217 = vector.extract_strided_slice %7 {offsets = [8, 24], sizes = [8, 8], strides = [1, 1]} : vector<16x96xf32> to vector<8x8xf32>
    %cst_66 = arith.constant 0.353553385 : f32
    %218 = vector.broadcast %cst_66 : f32 to vector<8x8xf32>
    %219 = arith.mulf %217, %218 : vector<8x8xf32>
    %220 = arith.truncf %219 : vector<8x8xf32> to vector<8x8xbf16>
    %221 = vector.extract_strided_slice %7 {offsets = [8, 56], sizes = [8, 8], strides = [1, 1]} : vector<16x96xf32> to vector<8x8xf32>
    %222 = arith.truncf %221 : vector<8x8xf32> to vector<8x8xbf16>
    %223 = vector.extract_strided_slice %7 {offsets = [8, 88], sizes = [8, 8], strides = [1, 1]} : vector<16x96xf32> to vector<8x8xf32>
    %224 = arith.truncf %223 : vector<8x8xf32> to vector<8x8xbf16>
    %cst_67 = arith.constant dense<0.000000e+00> : vector<8x8xf32>
    %225 = tpu.matmul %220, %222, %cst_67 {dimension_numbers = #tpu.dot_dimension_numbers<[1], [1], [0], [0], [0, 0, 1, 0], [], []>} : vector<8x8xbf16>, vector<8x8xbf16>, vector<8x8xf32> -> vector<8x8xf32>
    %cst_68 = arith.constant dense<0xFF800000> : vector<8xf32>
    %226 = vector.multi_reduction <maximumf>, %225, %cst_68 [1] : vector<8x8xf32> to vector<8xf32>
    %227 = vector.shape_cast %226 : vector<8xf32> to vector<8x1xf32>
    %228 = vector.broadcast %227 : vector<8x1xf32> to vector<8x8xf32>
    %229 = arith.subf %225, %228 : vector<8x8xf32>
    %230 = math.exp %229 : vector<8x8xf32>
    %cst_69 = arith.constant dense<0.000000e+00> : vector<8xf32>
    %231 = vector.multi_reduction <add>, %230, %cst_69 [1] : vector<8x8xf32> to vector<8xf32>
    %232 = vector.shape_cast %231 : vector<8xf32> to vector<8x1xf32>
    %233 = tpu.reciprocal %232 {approx = true} : vector<8x1xf32> -> vector<8x1xf32>
    %234 = vector.broadcast %233 : vector<8x1xf32> to vector<8x8xf32>
    %235 = arith.mulf %230, %234 : vector<8x8xf32>
    %236 = arith.truncf %235 : vector<8x8xf32> to vector<8x8xbf16>
    %cst_70 = arith.constant dense<0.000000e+00> : vector<8x8xf32>
    %237 = tpu.matmul %236, %224, %cst_70 {dimension_numbers = #tpu.dot_dimension_numbers<[1], [0], [0], [1], [0, 0, 1, 1], [], []>} : vector<8x8xbf16>, vector<8x8xbf16>, vector<8x8xf32> -> vector<8x8xf32>
    %238 = arith.truncf %237 : vector<8x8xf32> to vector<8x8xbf16>
    %239 = vector.extract_strided_slice %8 {offsets = [24, 0], sizes = [8, 32], strides = [1, 1]} : vector<32x32xbf16> to vector<8x32xbf16>
    %cst_71 = arith.constant dense<0.000000e+00> : vector<8x32xf32>
    %240 = tpu.matmul %238, %239, %cst_71 {dimension_numbers = #tpu.dot_dimension_numbers<[1], [0], [0], [1], [0, 0, 1, 1], [], []>} : vector<8x8xbf16>, vector<8x32xbf16>, vector<8x32xf32> -> vector<8x32xf32>
    %241 = arith.addf %216, %240 : vector<8x32xf32>
    %242 = vector.broadcast %9 : vector<1x32xf32> to vector<8x32xf32>
    %243 = arith.addf %241, %242 : vector<8x32xf32>
    %244 = vector.extract_strided_slice %0 {offsets = [1, 0, 0], sizes = [1, 8, 32], strides = [1, 1, 1]} : vector<2x8x32xf32> to vector<1x8x32xf32>
    %245 = vector.shape_cast %244 : vector<1x8x32xf32> to vector<8x32xf32>
    %246 = arith.addf %245, %243 : vector<8x32xf32>
    %cst_72 = arith.constant dense<0.000000e+00> : vector<8xf32>
    %247 = vector.multi_reduction <add>, %246, %cst_72 [1] : vector<8x32xf32> to vector<8xf32>
    %248 = vector.shape_cast %247 : vector<8xf32> to vector<8x1xf32>
    %cst_73 = arith.constant 3.200000e+01 : f32
    %249 = vector.broadcast %cst_73 : f32 to vector<8x1xf32>
    %250 = arith.divf %248, %249 : vector<8x1xf32>
    %251 = vector.broadcast %250 : vector<8x1xf32> to vector<8x32xf32>
    %252 = arith.subf %246, %251 : vector<8x32xf32>
    %253 = arith.mulf %252, %252 : vector<8x32xf32>
    %cst_74 = arith.constant dense<0.000000e+00> : vector<8xf32>
    %254 = vector.multi_reduction <add>, %253, %cst_74 [1] : vector<8x32xf32> to vector<8xf32>
    %255 = vector.shape_cast %254 : vector<8xf32> to vector<8x1xf32>
    %cst_75 = arith.constant 3.200000e+01 : f32
    %256 = vector.broadcast %cst_75 : f32 to vector<8x1xf32>
    %257 = arith.divf %255, %256 : vector<8x1xf32>
    %cst_76 = arith.constant 9.99999974E-6 : f32
    %258 = vector.broadcast %cst_76 : f32 to vector<8x1xf32>
    %259 = arith.addf %257, %258 : vector<8x1xf32>
    %260 = math.rsqrt %259 : vector<8x1xf32>
    %261 = vector.broadcast %260 : vector<8x1xf32> to vector<8x32xf32>
    %262 = arith.mulf %252, %261 : vector<8x32xf32>
    %263 = vector.broadcast %10 : vector<1x32xf32> to vector<8x32xf32>
    %264 = arith.mulf %262, %263 : vector<8x32xf32>
    %265 = vector.broadcast %11 : vector<1x32xf32> to vector<8x32xf32>
    %266 = arith.addf %264, %265 : vector<8x32xf32>
    %c1 = arith.constant 1 : index
    %c0_77 = arith.constant 0 : index
    %c0_78 = arith.constant 0 : index
    %267 = vector.load %arg8[%c1, %c0_77, %c0_78] : memref<2x8x32xf32, #tpu.memory_space<vmem>>, vector<1x8x32xf32>
    %268 = vector.shape_cast %267 : vector<1x8x32xf32> to vector<8x32xf32>
    %269 = vector.shape_cast %266 : vector<8x32xf32> to vector<1x8x32xf32>
    tpu.vector_store %arg8[%c1, %c0_77, %c0_78], %269 {strides = array<i32>} : memref<2x8x32xf32, #tpu.memory_space<vmem>>, vector<1x8x32xf32>,
    return
  }
  func.func @transform_0(%arg0: i32) -> (i32, i32, i32) {
    %c0_i32 = arith.constant 0 : i32
    %c0_i32_0 = arith.constant 0 : i32
    %c0_i32_1 = arith.constant 0 : i32
    return %arg0, %c0_i32, %c0_i32_0 : i32, i32, i32
  }
  func.func @transform_1(%arg0: i32) -> (i32, i32) {
    %c0_i32 = arith.constant 0 : i32
    %c0_i32_0 = arith.constant 0 : i32
    %c0_i32_1 = arith.constant 0 : i32
    return %c0_i32, %c0_i32_0 : i32, i32
  }
  func.func @transform_2(%arg0: i32) -> (i32, i32) {
    %c0_i32 = arith.constant 0 : i32
    %c0_i32_0 = arith.constant 0 : i32
    %c0_i32_1 = arith.constant 0 : i32
    return %c0_i32, %c0_i32_0 : i32, i32
  }
  func.func @transform_3(%arg0: i32) -> (i32, i32) {
    %c0_i32 = arith.constant 0 : i32
    %c0_i32_0 = arith.constant 0 : i32
    %c0_i32_1 = arith.constant 0 : i32
    return %c0_i32, %c0_i32_0 : i32, i32
  }
  func.func @transform_4(%arg0: i32) -> (i32, i32) {
    %c0_i32 = arith.constant 0 : i32
    %c0_i32_0 = arith.constant 0 : i32
    %c0_i32_1 = arith.constant 0 : i32
    return %c0_i32, %c0_i32_0 : i32, i32
  }
  func.func @transform_5(%arg0: i32) -> (i32, i32) {
    %c0_i32 = arith.constant 0 : i32
    %c0_i32_0 = arith.constant 0 : i32
    %c0_i32_1 = arith.constant 0 : i32
    return %c0_i32, %c0_i32_0 : i32, i32
  }
  func.func @transform_6(%arg0: i32) -> (i32, i32) {
    %c0_i32 = arith.constant 0 : i32
    %c0_i32_0 = arith.constant 0 : i32
    %c0_i32_1 = arith.constant 0 : i32
    return %c0_i32, %c0_i32_0 : i32, i32
  }
  func.func @transform_7(%arg0: i32) -> (i32, i32, i32) {
    %c0_i32 = arith.constant 0 : i32
    %c0_i32_0 = arith.constant 0 : i32
    %c0_i32_1 = arith.constant 0 : i32
    return %arg0, %c0_i32, %c0_i32_0 : i32, i32, i32
  }
}

</mosaic_0001>

<llo_original>
// kernel: tpu_custom_call.1
$region0: #{tpu_custom_call.1}
  #allocation0 [shape = 'u32[]', space=smem, size = 0x4, offset = 0x4, fixed_abs, tag = 'smem constant byte address 0x4 - core index']
  #allocation1 [shape = 'u32[144,128]{1,0:T(1,128)}', space=vmem, size = 0x12000, scoped, tag = 'internal scratch']
  %s0 = inlined_call_operand.hbm [shape: f32[2,8,32], index: 0, kind: input, shape index: {}]
  %s1 = inlined_call_operand.hbm [shape: bf16[32,96], index: 1, kind: input, shape index: {}]
  %s2 = inlined_call_operand.vmem [shape: f32[1,96], index: 2, kind: input, shape index: {}]
  %s3 = inlined_call_operand.hbm [shape: bf16[32,32], index: 3, kind: input, shape index: {}]
  %s4 = inlined_call_operand.vmem [shape: f32[1,32], index: 4, kind: input, shape index: {}]
  %s5 = inlined_call_operand.vmem [shape: f32[1,32], index: 5, kind: input, shape index: {}]
  %s6 = inlined_call_operand.vmem [shape: f32[1,32], index: 6, kind: input, shape index: {}]
  %s7 = inlined_call_operand.hbm [shape: f32[2,8,32], index: 7, kind: output, shape index: {}]
  %s8 = sld [smem:[#allocation0]]
  $region50: #{tpu_custom_call.1} parent=0
    _
  %s10 = ssub.s32 1, %s8
  %s11 = scalar_select 0, %s10, %s8
  $region1: #{tpu_custom_call.1} parent=0
    #allocation2 [shape = 'u8[8192]{0}', space=vmem, size = 0x2000, scoped, tag = 'input window, operand 0, single buffered']
    #allocation3 [shape = 's32[1]{0}', space=sflag, size = 0x4, scoped, tag = 'scoped memory for tpu_custom_call.1']
    #allocation4 [shape = 's32[1]{0}', space=sflag, size = 0x4, scoped, tag = 'scoped memory for tpu_custom_call.1']
    #allocation5 [shape = 'u8[8192]{0}', space=vmem, size = 0x2000, scoped, tag = 'input window, operand 1, single buffered']
    #allocation6 [shape = 's32[1]{0}', space=sflag, size = 0x4, scoped, tag = 'scoped memory for tpu_custom_call.1']
    #allocation7 [shape = 'u8[8192]{0}', space=vmem, size = 0x2000, scoped, tag = 'input window, operand 3, single buffered']
    #allocation8 [shape = 'u8[8192]{0}', space=vmem, size = 0x2000, scoped, tag = 'output window, operand 0, single buffered']
    %12 = vsyncpa [#allocation3], 0
    %13 = vsyncpa [#allocation6], 0
    %14 = vsyncpa [#allocation4], 0
    // Predicated region
    $region2: #{tpu_custom_call.1} parent=1 // pred_check
      _
    $region3: #{tpu_custom_call.1} parent=1 // pred_check_branch
      %16 = sbr.rel (0) target = $region5
    $region4: #{tpu_custom_call.1} parent=1 // pred_region
      %s18 = ssub.s32 256, 256
      %19 = vsyncadd [#allocation3], %s18
      %s20 = sshll.u32 [#allocation2], 4
      %s21 = int_to_ptr.vmem [resolvable:$true] %s20
      %26 = dma.hbm_to_vmem [thread:$0]  %s0, 256, %s21, [#allocation3], 128, 128, 8
    $region5: #{tpu_custom_call.1} parent=1 // pred_fallthru
      _
    // Predicated region
    $region6: #{tpu_custom_call.1} parent=1 // pred_check
      _
    $region7: #{tpu_custom_call.1} parent=1 // pred_check_branch
      %28 = sbr.rel (0) target = $region9
    $region8: #{tpu_custom_call.1} parent=1 // pred_region
      %s30 = ssub.s32 256, 256
      %31 = vsyncadd [#allocation6], %s30
      %s32 = sshll.u32 [#allocation5], 4
      %s33 = int_to_ptr.vmem [resolvable:$true] %s32
      %38 = dma.hbm_to_vmem [thread:$0]  %s1, 256, %s33, [#allocation6], 64, 64, 4
    $region9: #{tpu_custom_call.1} parent=1 // pred_fallthru
      _
    // Predicated region
    $region10: #{tpu_custom_call.1} parent=1 // pred_check
      _
    $region11: #{tpu_custom_call.1} parent=1 // pred_check_branch
      %40 = sbr.rel (0) target = $region13
    $region12: #{tpu_custom_call.1} parent=1 // pred_region
      _
    $region13: #{tpu_custom_call.1} parent=1 // pred_fallthru
      _
    // Predicated region
    $region14: #{tpu_custom_call.1} parent=1 // pred_check
      _
    $region15: #{tpu_custom_call.1} parent=1 // pred_check_branch
      %42 = sbr.rel (0) target = $region17
    $region16: #{tpu_custom_call.1} parent=1 // pred_region
      %s44 = ssub.s32 256, 256
      %45 = vsyncadd [#allocation6], %s44
      %s46 = sshll.u32 [#allocation7], 4
      %s47 = int_to_ptr.vmem [resolvable:$true] %s46
      %52 = dma.hbm_to_vmem [thread:$0]  %s3, 256, %s47, [#allocation6], 64, 64, 4
    $region17: #{tpu_custom_call.1} parent=1 // pred_fallthru
      _
    // Predicated region
    $region18: #{tpu_custom_call.1} parent=1 // pred_check
      _
    $region19: #{tpu_custom_call.1} parent=1 // pred_check_branch
      %54 = sbr.rel (0) target = $region21
    $region20: #{tpu_custom_call.1} parent=1 // pred_region
      _
    $region21: #{tpu_custom_call.1} parent=1 // pred_fallthru
      _
    // Predicated region
    $region22: #{tpu_custom_call.1} parent=1 // pred_check
      _
    $region23: #{tpu_custom_call.1} parent=1 // pred_check_branch
      %56 = sbr.rel (0) target = $region25
    $region24: #{tpu_custom_call.1} parent=1 // pred_region
      _
    $region25: #{tpu_custom_call.1} parent=1 // pred_fallthru
      _
    // Predicated region
    $region26: #{tpu_custom_call.1} parent=1 // pred_check
      _
    $region27: #{tpu_custom_call.1} parent=1 // pred_check_branch
      %58 = sbr.rel (0) target = $region29
    $region28: #{tpu_custom_call.1} parent=1 // pred_region
      _
    $region29: #{tpu_custom_call.1} parent=1 // pred_fallthru
      _
    // Predicated region
    $region30: #{tpu_custom_call.1} parent=1 // pred_check
      _
    $region31: #{tpu_custom_call.1} parent=1 // pred_check_branch
      %60 = sbr.rel (0) target = $region33
    $region32: #{tpu_custom_call.1} parent=1 // pred_region
      %61 = dma.done [#allocation3], 256
    $region33: #{tpu_custom_call.1} parent=1 // pred_fallthru
      _
    // Predicated region
    $region34: #{tpu_custom_call.1} parent=1 // pred_check
      _
    $region35: #{tpu_custom_call.1} parent=1 // pred_check_branch
      %63 = sbr.rel (0) target = $region37
    $region36: #{tpu_custom_call.1} parent=1 // pred_region
      %64 = dma.done [#allocation6], 256
    $region37: #{tpu_custom_call.1} parent=1 // pred_fallthru
      _
    // Predicated region
    $region38: #{tpu_custom_call.1} parent=1 // pred_check
      _
    $region39: #{tpu_custom_call.1} parent=1 // pred_check_branch
      %66 = sbr.rel (0) target = $region41
    $region40: #{tpu_custom_call.1} parent=1 // pred_region
      %67 = dma.done [#allocation6], 256
    $region41: #{tpu_custom_call.1} parent=1 // pred_fallthru
      _
    %v69 = vld [vmem:[#allocation2] sm:$0xff]
    %v70 = vld [vmem:[#allocation2 + $0x8] sm:$0xff]
    %v71 = vpack.c.bf16 %v70, %v69
    %v72 = vld [vmem:[#allocation5] sm:$0xf]
    %v73 = vld [vmem:[#allocation5 + $0x4] sm:$0xf]
    %v74 = vld [vmem:[#allocation5 + $0x8] sm:$0xf]
    %v75 = vld [vmem:[#allocation5 + $0xc] sm:$0xf]
    %v76 = vld [vmem:[%s2] sm:$0x1]
    %v78 = vlaneseq
    %v79 = vshrl.u32 %v78, 7
    %v80 = vsub.s32 0, %v79
    %v81 = vrot.slane %v76, %v80
    %v87 = vunpack.c.l.b16 %v72
    %v88 = vunpack.c.l.b16 %v73
    %v89 = vunpack.c.l.b16 %v74
    %v90 = vunpack.c.l.b16 %v75
    %v91 = vpack.c.b16 %v88, %v87
    %v92 = vpack.c.b16 %v90, %v89
    %vm95 = vcmask 261120
    %v97 = vsel %vm95, %v71, 0
    %99 = vmatprep.subr.bf16.mxu0 0
    %100 = vmatpush1.bf16.msra.mxu0 %v91
    %101 = vmatprep.subr.bf16.mxu0 0
    %102 = vmatpush1.bf16.msra.mxu0 %v92
    %103 = vmatprep.subr.bf16.mxu0 0
    %104 = vmatpush1.bf16.msra.mxu0 0
    %105 = vmatprep.subr.bf16.mxu0 0
    %106 = vmatpush1.bf16.msra.mxu0 0
    %107 = vmatprep.subr.bf16.mxu0 0
    %108 = vmatpush1.bf16.msra.mxu0 0
    %109 = vmatprep.subr.bf16.mxu0 0
    %110 = vmatpush1.bf16.msra.mxu0 0
    %111 = vmatprep.subr.bf16.mxu0 0
    %112 = vmatpush1.bf16.msra.mxu0 0
    %113 = vmatprep.subr.bf16.mxu0 0
    %114 = vmatpush1.bf16.msra.mxu0 0
    %115 = vmatprep.subr.bf16.mxu0 0
    %116 = vmatpush1.bf16.msra.mxu0 0
    %117 = vmatprep.subr.bf16.mxu0 0
    %118 = vmatpush1.bf16.msra.mxu0 0
    %119 = vmatprep.subr.bf16.mxu0 0
    %120 = vmatpush1.bf16.msra.mxu0 0
    %121 = vmatprep.subr.bf16.mxu0 0
    %122 = vmatpush1.bf16.msra.mxu0 0
    %123 = vmatprep.subr.bf16.mxu0 0
    %124 = vmatpush1.bf16.msra.mxu0 0
    %125 = vmatprep.subr.bf16.mxu0 0
    %126 = vmatpush1.bf16.msra.mxu0 0
    %127 = vmatprep.subr.bf16.mxu0 0
    %128 = vmatpush1.bf16.msra.mxu0 0
    %129 = vmatprep.subr.bf16.mxu0 0
    %130 = vmatpush1.bf16.msra.mxu0 0
    %131 = vmatprep.mubr.bf16.mxu0 0
    %132 = vmatmul.mubr.bf16.gmra.mrb[0].mxu0 %v97
    %v133 = vpop.f32.mrb[0].mxu0
    %v134 = vadd.f32 %v81, %v133
    %v135 = vpop.f32.mrb[0].mxu0
    %v136 = vpop.f32.mrb[0].mxu0
    %v137 = vadd.f32 %v81, %v136
    %v138 = vpop.f32.mrb[0].mxu0
    %139 = vdwg.mxu0
    %v140 = vld [vmem:[#allocation7] sm:$0xf]
    %v141 = vld [vmem:[#allocation7 + $0x4] sm:$0xf]
    %v142 = vld [vmem:[#allocation7 + $0x8] sm:$0xf]
    %v143 = vld [vmem:[#allocation7 + $0xc] sm:$0xf]
    %v144 = vld [vmem:[%s4] sm:$0x1]
    %v145 = vld [vmem:[%s5] sm:$0x1]
    %v146 = vld [vmem:[%s6] sm:$0x1]
    %v147 = vmul.f32 %v134, 0.35355338
    %v148 = vpack.c.bf16 %v147, %v147
    %v149 = vpack.c.bf16 %v134, %v134
    %151 = vrot.lane.b32.xlu0 %v149, 96
    %v152 = vpop.permute.xlu0 %151
    %vm153 = vcmask 64512
    %v155 = vsel %vm153, %v148, 0
    %v158 = vsel %vm153, %v152, 0
    %160 = vmatprep.subr.bf16.mxu0 0
    %161 = vmatpush1.bf16.xpose.msra.mxu0 %v158
    %162 = vmatprep.subr.bf16.mxu0 0
    %163 = vmatpush1.bf16.xpose.msra.mxu0 0
    %164 = vmatprep.subr.bf16.mxu0 0
    %165 = vmatpush1.bf16.xpose.msra.mxu0 0
    %166 = vmatprep.subr.bf16.mxu0 0
    %167 = vmatpush1.bf16.xpose.msra.mxu0 0
    %168 = vmatprep.subr.bf16.mxu0 0
    %169 = vmatpush1.bf16.xpose.msra.mxu0 0
    %170 = vmatprep.subr.bf16.mxu0 0
    %171 = vmatpush1.bf16.xpose.msra.mxu0 0
    %172 = vmatprep.subr.bf16.mxu0 0
    %173 = vmatpush1.bf16.xpose.msra.mxu0 0
    %174 = vmatprep.subr.bf16.mxu0 0
    %175 = vmatpush1.bf16.xpose.msra.mxu0 0
    %176 = vmatprep.subr.bf16.mxu0 0
    %177 = vmatpush1.bf16.xpose.msra.mxu0 0
    %178 = vmatprep.subr.bf16.mxu0 0
    %179 = vmatpush1.bf16.xpose.msra.mxu0 0
    %180 = vmatprep.subr.bf16.mxu0 0
    %181 = vmatpush1.bf16.xpose.msra.mxu0 0
    %182 = vmatprep.subr.bf16.mxu0 0
    %183 = vmatpush1.bf16.xpose.msra.mxu0 0
    %184 = vmatprep.subr.bf16.mxu0 0
    %185 = vmatpush1.bf16.xpose.msra.mxu0 0
    %186 = vmatprep.subr.bf16.mxu0 0
    %187 = vmatpush1.bf16.xpose.msra.mxu0 0
    %188 = vmatprep.subr.bf16.mxu0 0
    %189 = vmatpush1.bf16.xpose.msra.mxu0 0
    %190 = vmatprep.subr.bf16.mxu0 0
    %191 = vmatpush1.bf16.xpose.msra.mxu0 0
    %192 = vmatprep.mubr.bf16.mxu0 0
    %193 = vmatmul.mubr.bf16.gmra.mrb[0].mxu0 %v155
    %v194 = vpop.f32.mrb[0].mxu0
    %v195 = vadd.f32 0.0, %v194
    %v196 = vpop.f32.mrb[0].mxu0
    %v197 = vpop.f32.mrb[0].mxu0
    %v198 = vpop.f32.mrb[0].mxu0
    %199 = vdwg.mxu0
    %v200 = vsel %vm153, %v195, -inf
    %201 = vmax.xlane.f32.xlu0 %v200
    %v202 = vpop.xlane.xlu0 %201
    %v203 = vsub.f32 %v195, %v202
    %v204 = vmul.f32 %v203, 1.442695
    %v205 = vpow.pop %v204
    %v206 = vsel %vm153, %v205, 0.0
    %207 = vadd.xlane.f32.xlu0 %v206
    %v208 = vpop.xlane.xlu0 %207
    %v209 = vrcp.pop %v208
    %v210 = vmul.f32 %v205, %v209
    %v211 = vpack.c.bf16 %v210, %v210
    %212 = vrot.lane.b32.xlu0 %v149, 64
    %v213 = vpop.permute.xlu0 %212
    %v215 = vsel %vm153, %v211, 0
    %vm217 = vcmask 1043456
    %v219 = vsel %vm217, %v213, 0
    %221 = vmatprep.subr.bf16.mxu0 0
    %222 = vmatpush1.bf16.msra.mxu0 %v219
    %223 = vmatprep.subr.bf16.mxu0 0
    %224 = vmatpush1.bf16.msra.mxu0 0
    %225 = vmatprep.subr.bf16.mxu0 0
    %226 = vmatpush1.bf16.msra.mxu0 0
    %227 = vmatprep.subr.bf16.mxu0 0
    %228 = vmatpush1.bf16.msra.mxu0 0
    %229 = vmatprep.subr.bf16.mxu0 0
    %230 = vmatpush1.bf16.msra.mxu0 0
    %231 = vmatprep.subr.bf16.mxu0 0
    %232 = vmatpush1.bf16.msra.mxu0 0
    %233 = vmatprep.subr.bf16.mxu0 0
    %234 = vmatpush1.bf16.msra.mxu0 0
    %235 = vmatprep.subr.bf16.mxu0 0
    %236 = vmatpush1.bf16.msra.mxu0 0
    %237 = vmatprep.subr.bf16.mxu0 0
    %238 = vmatpush1.bf16.msra.mxu0 0
    %239 = vmatprep.subr.bf16.mxu0 0
    %240 = vmatpush1.bf16.msra.mxu0 0
    %241 = vmatprep.subr.bf16.mxu0 0
    %242 = vmatpush1.bf16.msra.mxu0 0
    %243 = vmatprep.subr.bf16.mxu0 0
    %244 = vmatpush1.bf16.msra.mxu0 0
    %245 = vmatprep.subr.bf16.mxu0 0
    %246 = vmatpush1.bf16.msra.mxu0 0
    %247 = vmatprep.subr.bf16.mxu0 0
    %248 = vmatpush1.bf16.msra.mxu0 0
    %249 = vmatprep.subr.bf16.mxu0 0
    %250 = vmatpush1.bf16.msra.mxu0 0
    %251 = vmatprep.subr.bf16.mxu0 0
    %252 = vmatpush1.bf16.msra.mxu0 0
    %253 = vmatprep.mubr.bf16.mxu0 0
    %254 = vmatmul.mubr.bf16.gmra.mrb[0].mxu0 %v215
    %v255 = vpop.f32.mrb[0].mxu0
    %v256 = vadd.f32 0.0, %v255
    %v257 = vpop.f32.mrb[0].mxu0
    %v258 = vpop.f32.mrb[0].mxu0
    %v259 = vpop.f32.mrb[0].mxu0
    %260 = vdwg.mxu0
    %v261 = vpack.c.bf16 %v256, %v256
    %263 = vrot.lane.b32.xlu0 %v148, 120
    %v264 = vpop.permute.xlu0 %263
    %265 = vrot.lane.b32.xlu0 %v149, 88
    %v266 = vpop.permute.xlu0 %265
    %v268 = vsel %vm153, %v264, 0
    %v271 = vsel %vm153, %v266, 0
    %273 = vmatprep.subr.bf16.mxu0 0
    %274 = vmatpush1.bf16.xpose.msra.mxu0 %v271
    %275 = vmatprep.subr.bf16.mxu0 0
    %276 = vmatpush1.bf16.xpose.msra.mxu0 0
    %277 = vmatprep.subr.bf16.mxu0 0
    %278 = vmatpush1.bf16.xpose.msra.mxu0 0
    %279 = vmatprep.subr.bf16.mxu0 0
    %280 = vmatpush1.bf16.xpose.msra.mxu0 0
    %281 = vmatprep.subr.bf16.mxu0 0
    %282 = vmatpush1.bf16.xpose.msra.mxu0 0
    %283 = vmatprep.subr.bf16.mxu0 0
    %284 = vmatpush1.bf16.xpose.msra.mxu0 0
    %285 = vmatprep.subr.bf16.mxu0 0
    %286 = vmatpush1.bf16.xpose.msra.mxu0 0
    %287 = vmatprep.subr.bf16.mxu0 0
    %288 = vmatpush1.bf16.xpose.msra.mxu0 0
    %289 = vmatprep.subr.bf16.mxu0 0
    %290 = vmatpush1.bf16.xpose.msra.mxu0 0
    %291 = vmatprep.subr.bf16.mxu0 0
    %292 = vmatpush1.bf16.xpose.msra.mxu0 0
    %293 = vmatprep.subr.bf16.mxu0 0
    %294 = vmatpush1.bf16.xpose.msra.mxu0 0
    %295 = vmatprep.subr.bf16.mxu0 0
    %296 = vmatpush1.bf16.xpose.msra.mxu0 0
    %297 = vmatprep.subr.bf16.mxu0 0
    %298 = vmatpush1.bf16.xpose.msra.mxu0 0
    %299 = vmatprep.subr.bf16.mxu0 0
    %300 = vmatpush1.bf16.xpose.msra.mxu0 0
    %301 = vmatprep.subr.bf16.mxu0 0
    %302 = vmatpush1.bf16.xpose.msra.mxu0 0
    %303 = vmatprep.subr.bf16.mxu0 0
    %304 = vmatpush1.bf16.xpose.msra.mxu0 0
    %305 = vmatprep.mubr.bf16.mxu0 0
    %306 = vmatmul.mubr.bf16.gmra.mrb[0].mxu0 %v268
    %v307 = vpop.f32.mrb[0].mxu0
    %v308 = vadd.f32 0.0, %v307
    %v309 = vpop.f32.mrb[0].mxu0
    %v310 = vpop.f32.mrb[0].mxu0
    %v311 = vpop.f32.mrb[0].mxu0
    %312 = vdwg.mxu0
    %v313 = vsel %vm153, %v308, -inf
    %314 = vmax.xlane.f32.xlu0 %v313
    %v315 = vpop.xlane.xlu0 %314
    %v316 = vsub.f32 %v308, %v315
    %v317 = vmul.f32 %v316, 1.442695
    %v318 = vpow.pop %v317
    %v319 = vsel %vm153, %v318, 0.0
    %320 = vadd.xlane.f32.xlu0 %v319
    %v321 = vpop.xlane.xlu0 %320
    %v322 = vrcp.pop %v321
    %v323 = vmul.f32 %v318, %v322
    %v324 = vpack.c.bf16 %v323, %v323
    %325 = vrot.lane.b32.xlu0 %v149, 56
    %v326 = vpop.permute.xlu0 %325
    %v328 = vsel %vm153, %v324, 0
    %v331 = vsel %vm217, %v326, 0
    %333 = vmatprep.subr.bf16.mxu0 0
    %334 = vmatpush1.bf16.msra.mxu0 %v331
    %335 = vmatprep.subr.bf16.mxu0 0
    %336 = vmatpush1.bf16.msra.mxu0 0
    %337 = vmatprep.subr.bf16.mxu0 0
    %338 = vmatpush1.bf16.msra.mxu0 0
    %339 = vmatprep.subr.bf16.mxu0 0
    %340 = vmatpush1.bf16.msra.mxu0 0
    %341 = vmatprep.subr.bf16.mxu0 0
    %342 = vmatpush1.bf16.msra.mxu0 0
    %343 = vmatprep.subr.bf16.mxu0 0
    %344 = vmatpush1.bf16.msra.mxu0 0
    %345 = vmatprep.subr.bf16.mxu0 0
    %346 = vmatpush1.bf16.msra.mxu0 0
    %347 = vmatprep.subr.bf16.mxu0 0
    %348 = vmatpush1.bf16.msra.mxu0 0
    %349 = vmatprep.subr.bf16.mxu0 0
    %350 = vmatpush1.bf16.msra.mxu0 0
    %351 = vmatprep.subr.bf16.mxu0 0
    %352 = vmatpush1.bf16.msra.mxu0 0
    %353 = vmatprep.subr.bf16.mxu0 0
    %354 = vmatpush1.bf16.msra.mxu0 0
    %355 = vmatprep.subr.bf16.mxu0 0
    %356 = vmatpush1.bf16.msra.mxu0 0
    %357 = vmatprep.subr.bf16.mxu0 0
    %358 = vmatpush1.bf16.msra.mxu0 0
    %359 = vmatprep.subr.bf16.mxu0 0
    %360 = vmatpush1.bf16.msra.mxu0 0
    %361 = vmatprep.subr.bf16.mxu0 0
    %362 = vmatpush1.bf16.msra.mxu0 0
    %363 = vmatprep.subr.bf16.mxu0 0
    %364 = vmatpush1.bf16.msra.mxu0 0
    %365 = vmatprep.mubr.bf16.mxu0 0
    %366 = vmatmul.mubr.bf16.gmra.mrb[0].mxu0 %v328
    %v367 = vpop.f32.mrb[0].mxu0
    %v368 = vadd.f32 0.0, %v367
    %v369 = vpop.f32.mrb[0].mxu0
    %v370 = vpop.f32.mrb[0].mxu0
    %v371 = vpop.f32.mrb[0].mxu0
    %372 = vdwg.mxu0
    %v373 = vpack.c.bf16 %v368, %v368
    %v375 = vsel %vm153, %v373, 0
    %v378 = vsel %vm217, %v141, 0
    %380 = vmatprep.subr.bf16.mxu0 0
    %381 = vmatpush1.bf16.msra.mxu0 %v378
    %382 = vmatprep.subr.bf16.mxu0 0
    %383 = vmatpush1.bf16.msra.mxu0 0
    %384 = vmatprep.subr.bf16.mxu0 0
    %385 = vmatpush1.bf16.msra.mxu0 0
    %386 = vmatprep.subr.bf16.mxu0 0
    %387 = vmatpush1.bf16.msra.mxu0 0
    %388 = vmatprep.subr.bf16.mxu0 0
    %389 = vmatpush1.bf16.msra.mxu0 0
    %390 = vmatprep.subr.bf16.mxu0 0
    %391 = vmatpush1.bf16.msra.mxu0 0
    %392 = vmatprep.subr.bf16.mxu0 0
    %393 = vmatpush1.bf16.msra.mxu0 0
    %394 = vmatprep.subr.bf16.mxu0 0
    %395 = vmatpush1.bf16.msra.mxu0 0
    %396 = vmatprep.subr.bf16.mxu0 0
    %397 = vmatpush1.bf16.msra.mxu0 0
    %398 = vmatprep.subr.bf16.mxu0 0
    %399 = vmatpush1.bf16.msra.mxu0 0
    %400 = vmatprep.subr.bf16.mxu0 0
    %401 = vmatpush1.bf16.msra.mxu0 0
    %402 = vmatprep.subr.bf16.mxu0 0
    %403 = vmatpush1.bf16.msra.mxu0 0
    %404 = vmatprep.subr.bf16.mxu0 0
    %405 = vmatpush1.bf16.msra.mxu0 0
    %406 = vmatprep.subr.bf16.mxu0 0
    %407 = vmatpush1.bf16.msra.mxu0 0
    %408 = vmatprep.subr.bf16.mxu0 0
    %409 = vmatpush1.bf16.msra.mxu0 0
    %410 = vmatprep.subr.bf16.mxu0 0
    %411 = vmatpush1.bf16.msra.mxu0 0
    %412 = vmatprep.mubr.bf16.mxu0 0
    %413 = vmatmul.mubr.bf16.gmra.mrb[0].mxu0 %v375
    %v414 = vpop.f32.mrb[0].mxu0
    %v415 = vadd.f32 0.0, %v414
    %v416 = vpop.f32.mrb[0].mxu0
    %v417 = vpop.f32.mrb[0].mxu0
    %v418 = vpop.f32.mrb[0].mxu0
    %419 = vdwg.mxu0
    %v421 = vsel %vm153, %v261, 0
    %v424 = vsel %vm217, %v140, 0
    %426 = vmatprep.subr.bf16.mxu0 0
    %427 = vmatpush1.bf16.msra.mxu0 %v424
    %428 = vmatprep.subr.bf16.mxu0 0
    %429 = vmatpush1.bf16.msra.mxu0 0
    %430 = vmatprep.subr.bf16.mxu0 0
    %431 = vmatpush1.bf16.msra.mxu0 0
    %432 = vmatprep.subr.bf16.mxu0 0
    %433 = vmatpush1.bf16.msra.mxu0 0
    %434 = vmatprep.subr.bf16.mxu0 0
    %435 = vmatpush1.bf16.msra.mxu0 0
    %436 = vmatprep.subr.bf16.mxu0 0
    %437 = vmatpush1.bf16.msra.mxu0 0
    %438 = vmatprep.subr.bf16.mxu0 0
    %439 = vmatpush1.bf16.msra.mxu0 0
    %440 = vmatprep.subr.bf16.mxu0 0
    %441 = vmatpush1.bf16.msra.mxu0 0
    %442 = vmatprep.subr.bf16.mxu0 0
    %443 = vmatpush1.bf16.msra.mxu0 0
    %444 = vmatprep.subr.bf16.mxu0 0
    %445 = vmatpush1.bf16.msra.mxu0 0
    %446 = vmatprep.subr.bf16.mxu0 0
    %447 = vmatpush1.bf16.msra.mxu0 0
    %448 = vmatprep.subr.bf16.mxu0 0
    %449 = vmatpush1.bf16.msra.mxu0 0
    %450 = vmatprep.subr.bf16.mxu0 0
    %451 = vmatpush1.bf16.msra.mxu0 0
    %452 = vmatprep.subr.bf16.mxu0 0
    %453 = vmatpush1.bf16.msra.mxu0 0
    %454 = vmatprep.subr.bf16.mxu0 0
    %455 = vmatpush1.bf16.msra.mxu0 0
    %456 = vmatprep.subr.bf16.mxu0 0
    %457 = vmatpush1.bf16.msra.mxu0 0
    %458 = vmatprep.mubr.bf16.mxu0 0
    %459 = vmatmul.mubr.bf16.gmra.mrb[0].mxu0 %v421
    %v460 = vpop.f32.mrb[0].mxu0
    %v461 = vadd.f32 %v415, %v460
    %v462 = vpop.f32.mrb[0].mxu0
    %v463 = vpop.f32.mrb[0].mxu0
    %v464 = vpop.f32.mrb[0].mxu0
    %465 = vdwg.mxu0
    %466 = vrot.lane.b32.xlu0 %v148, 112
    %v467 = vpop.permute.xlu0 %466
    %468 = vrot.lane.b32.xlu0 %v149, 80
    %v469 = vpop.permute.xlu0 %468
    %v471 = vsel %vm153, %v467, 0
    %v474 = vsel %vm153, %v469, 0
    %476 = vmatprep.subr.bf16.mxu0 0
    %477 = vmatpush1.bf16.xpose.msra.mxu0 %v474
    %478 = vmatprep.subr.bf16.mxu0 0
    %479 = vmatpush1.bf16.xpose.msra.mxu0 0
    %480 = vmatprep.subr.bf16.mxu0 0
    %481 = vmatpush1.bf16.xpose.msra.mxu0 0
    %482 = vmatprep.subr.bf16.mxu0 0
    %483 = vmatpush1.bf16.xpose.msra.mxu0 0
    %484 = vmatprep.subr.bf16.mxu0 0
    %485 = vmatpush1.bf16.xpose.msra.mxu0 0
    %486 = vmatprep.subr.bf16.mxu0 0
    %487 = vmatpush1.bf16.xpose.msra.mxu0 0
    %488 = vmatprep.subr.bf16.mxu0 0
    %489 = vmatpush1.bf16.xpose.msra.mxu0 0
    %490 = vmatprep.subr.bf16.mxu0 0
    %491 = vmatpush1.bf16.xpose.msra.mxu0 0
    %492 = vmatprep.subr.bf16.mxu0 0
    %493 = vmatpush1.bf16.xpose.msra.mxu0 0
    %494 = vmatprep.subr.bf16.mxu0 0
    %495 = vmatpush1.bf16.xpose.msra.mxu0 0
    %496 = vmatprep.subr.bf16.mxu0 0
    %497 = vmatpush1.bf16.xpose.msra.mxu0 0
    %498 = vmatprep.subr.bf16.mxu0 0
    %499 = vmatpush1.bf16.xpose.msra.mxu0 0
    %500 = vmatprep.subr.bf16.mxu0 0
    %501 = vmatpush1.bf16.xpose.msra.mxu0 0
    %502 = vmatprep.subr.bf16.mxu0 0
    %503 = vmatpush1.bf16.xpose.msra.mxu0 0
    %504 = vmatprep.subr.bf16.mxu0 0
    %505 = vmatpush1.bf16.xpose.msra.mxu0 0
    %506 = vmatprep.subr.bf16.mxu0 0
    %507 = vmatpush1.bf16.xpose.msra.mxu0 0
    %508 = vmatprep.mubr.bf16.mxu0 0
    %509 = vmatmul.mubr.bf16.gmra.mrb[0].mxu0 %v471
    %v510 = vpop.f32.mrb[0].mxu0
    %v511 = vadd.f32 0.0, %v510
    %v512 = vpop.f32.mrb[0].mxu0
    %v513 = vpop.f32.mrb[0].mxu0
    %v514 = vpop.f32.mrb[0].mxu0
    %515 = vdwg.mxu0
    %v516 = vsel %vm153, %v511, -inf
    %517 = vmax.xlane.f32.xlu0 %v516
    %v518 = vpop.xlane.xlu0 %517
    %v519 = vsub.f32 %v511, %v518
    %v520 = vmul.f32 %v519, 1.442695
    %v521 = vpow.pop %v520
    %v522 = vsel %vm153, %v521, 0.0
    %523 = vadd.xlane.f32.xlu0 %v522
    %v524 = vpop.xlane.xlu0 %523
    %v525 = vrcp.pop %v524
    %v526 = vmul.f32 %v521, %v525
    %v527 = vpack.c.bf16 %v526, %v526
    %528 = vrot.lane.b32.xlu0 %v149, 48
    %v529 = vpop.permute.xlu0 %528
    %v531 = vsel %vm153, %v527, 0
    %v534 = vsel %vm217, %v529, 0
    %536 = vmatprep.subr.bf16.mxu0 0
    %537 = vmatpush1.bf16.msra.mxu0 %v534
    %538 = vmatprep.subr.bf16.mxu0 0
    %539 = vmatpush1.bf16.msra.mxu0 0
    %540 = vmatprep.subr.bf16.mxu0 0
    %541 = vmatpush1.bf16.msra.mxu0 0
    %542 = vmatprep.subr.bf16.mxu0 0
    %543 = vmatpush1.bf16.msra.mxu0 0
    %544 = vmatprep.subr.bf16.mxu0 0
    %545 = vmatpush1.bf16.msra.mxu0 0
    %546 = vmatprep.subr.bf16.mxu0 0
    %547 = vmatpush1.bf16.msra.mxu0 0
    %548 = vmatprep.subr.bf16.mxu0 0
    %549 = vmatpush1.bf16.msra.mxu0 0
    %550 = vmatprep.subr.bf16.mxu0 0
    %551 = vmatpush1.bf16.msra.mxu0 0
    %552 = vmatprep.subr.bf16.mxu0 0
    %553 = vmatpush1.bf16.msra.mxu0 0
    %554 = vmatprep.subr.bf16.mxu0 0
    %555 = vmatpush1.bf16.msra.mxu0 0
    %556 = vmatprep.subr.bf16.mxu0 0
    %557 = vmatpush1.bf16.msra.mxu0 0
    %558 = vmatprep.subr.bf16.mxu0 0
    %559 = vmatpush1.bf16.msra.mxu0 0
    %560 = vmatprep.subr.bf16.mxu0 0
    %561 = vmatpush1.bf16.msra.mxu0 0
    %562 = vmatprep.subr.bf16.mxu0 0
    %563 = vmatpush1.bf16.msra.mxu0 0
    %564 = vmatprep.subr.bf16.mxu0 0
    %565 = vmatpush1.bf16.msra.mxu0 0
    %566 = vmatprep.subr.bf16.mxu0 0
    %567 = vmatpush1.bf16.msra.mxu0 0
    %568 = vmatprep.mubr.bf16.mxu0 0
    %569 = vmatmul.mubr.bf16.gmra.mrb[0].mxu0 %v531
    %v570 = vpop.f32.mrb[0].mxu0
    %v571 = vadd.f32 0.0, %v570
    %v572 = vpop.f32.mrb[0].mxu0
    %v573 = vpop.f32.mrb[0].mxu0
    %v574 = vpop.f32.mrb[0].mxu0
    %575 = vdwg.mxu0
    %v576 = vpack.c.bf16 %v571, %v571
    %v578 = vsel %vm153, %v576, 0
    %v581 = vsel %vm217, %v142, 0
    %583 = vmatprep.subr.bf16.mxu0 0
    %584 = vmatpush1.bf16.msra.mxu0 %v581
    %585 = vmatprep.subr.bf16.mxu0 0
    %586 = vmatpush1.bf16.msra.mxu0 0
    %587 = vmatprep.subr.bf16.mxu0 0
    %588 = vmatpush1.bf16.msra.mxu0 0
    %589 = vmatprep.subr.bf16.mxu0 0
    %590 = vmatpush1.bf16.msra.mxu0 0
    %591 = vmatprep.subr.bf16.mxu0 0
    %592 = vmatpush1.bf16.msra.mxu0 0
    %593 = vmatprep.subr.bf16.mxu0 0
    %594 = vmatpush1.bf16.msra.mxu0 0
    %595 = vmatprep.subr.bf16.mxu0 0
    %596 = vmatpush1.bf16.msra.mxu0 0
    %597 = vmatprep.subr.bf16.mxu0 0
    %598 = vmatpush1.bf16.msra.mxu0 0
    %599 = vmatprep.subr.bf16.mxu0 0
    %600 = vmatpush1.bf16.msra.mxu0 0
    %601 = vmatprep.subr.bf16.mxu0 0
    %602 = vmatpush1.bf16.msra.mxu0 0
    %603 = vmatprep.subr.bf16.mxu0 0
    %604 = vmatpush1.bf16.msra.mxu0 0
    %605 = vmatprep.subr.bf16.mxu0 0
    %606 = vmatpush1.bf16.msra.mxu0 0
    %607 = vmatprep.subr.bf16.mxu0 0
    %608 = vmatpush1.bf16.msra.mxu0 0
    %609 = vmatprep.subr.bf16.mxu0 0
    %610 = vmatpush1.bf16.msra.mxu0 0
    %611 = vmatprep.subr.bf16.mxu0 0
    %612 = vmatpush1.bf16.msra.mxu0 0
    %613 = vmatprep.subr.bf16.mxu0 0
    %614 = vmatpush1.bf16.msra.mxu0 0
    %615 = vmatprep.mubr.bf16.mxu0 0
    %616 = vmatmul.mubr.bf16.gmra.mrb[0].mxu0 %v578
    %v617 = vpop.f32.mrb[0].mxu0
    %v618 = vadd.f32 0.0, %v617
    %v619 = vpop.f32.mrb[0].mxu0
    %v620 = vpop.f32.mrb[0].mxu0
    %v621 = vpop.f32.mrb[0].mxu0
    %622 = vdwg.mxu0
    %v623 = vadd.f32 %v461, %v618
    %624 = vrot.lane.b32.xlu0 %v148, 104
    %v625 = vpop.permute.xlu0 %624
    %626 = vrot.lane.b32.xlu0 %v149, 72
    %v627 = vpop.permute.xlu0 %626
    %v629 = vsel %vm153, %v625, 0
    %v632 = vsel %vm153, %v627, 0
    %634 = vmatprep.subr.bf16.mxu0 0
    %635 = vmatpush1.bf16.xpose.msra.mxu0 %v632
    %636 = vmatprep.subr.bf16.mxu0 0
    %637 = vmatpush1.bf16.xpose.msra.mxu0 0
    %638 = vmatprep.subr.bf16.mxu0 0
    %639 = vmatpush1.bf16.xpose.msra.mxu0 0
    %640 = vmatprep.subr.bf16.mxu0 0
    %641 = vmatpush1.bf16.xpose.msra.mxu0 0
    %642 = vmatprep.subr.bf16.mxu0 0
    %643 = vmatpush1.bf16.xpose.msra.mxu0 0
    %644 = vmatprep.subr.bf16.mxu0 0
    %645 = vmatpush1.bf16.xpose.msra.mxu0 0
    %646 = vmatprep.subr.bf16.mxu0 0
    %647 = vmatpush1.bf16.xpose.msra.mxu0 0
    %648 = vmatprep.subr.bf16.mxu0 0
    %649 = vmatpush1.bf16.xpose.msra.mxu0 0
    %650 = vmatprep.subr.bf16.mxu0 0
    %651 = vmatpush1.bf16.xpose.msra.mxu0 0
    %652 = vmatprep.subr.bf16.mxu0 0
    %653 = vmatpush1.bf16.xpose.msra.mxu0 0
    %654 = vmatprep.subr.bf16.mxu0 0
    %655 = vmatpush1.bf16.xpose.msra.mxu0 0
    %656 = vmatprep.subr.bf16.mxu0 0
    %657 = vmatpush1.bf16.xpose.msra.mxu0 0
    %658 = vmatprep.subr.bf16.mxu0 0
    %659 = vmatpush1.bf16.xpose.msra.mxu0 0
    %660 = vmatprep.subr.bf16.mxu0 0
    %661 = vmatpush1.bf16.xpose.msra.mxu0 0
    %662 = vmatprep.subr.bf16.mxu0 0
    %663 = vmatpush1.bf16.xpose.msra.mxu0 0
    %664 = vmatprep.subr.bf16.mxu0 0
    %665 = vmatpush1.bf16.xpose.msra.mxu0 0
    %666 = vmatprep.mubr.bf16.mxu0 0
    %667 = vmatmul.mubr.bf16.gmra.mrb[0].mxu0 %v629
    %v668 = vpop.f32.mrb[0].mxu0
    %v669 = vadd.f32 0.0, %v668
    %v670 = vpop.f32.mrb[0].mxu0
    %v671 = vpop.f32.mrb[0].mxu0
    %v672 = vpop.f32.mrb[0].mxu0
    %673 = vdwg.mxu0
    %v674 = vsel %vm153, %v669, -inf
    %675 = vmax.xlane.f32.xlu0 %v674
    %v676 = vpop.xlane.xlu0 %675
    %v677 = vsub.f32 %v669, %v676
    %v678 = vmul.f32 %v677, 1.442695
    %v679 = vpow.pop %v678
    %v680 = vsel %vm153, %v679, 0.0
    %681 = vadd.xlane.f32.xlu0 %v680
    %v682 = vpop.xlane.xlu0 %681
    %v683 = vrcp.pop %v682
    %v684 = vmul.f32 %v679, %v683
    %v685 = vpack.c.bf16 %v684, %v684
    %686 = vrot.lane.b32.xlu0 %v149, 40
    %v687 = vpop.permute.xlu0 %686
    %v689 = vsel %vm153, %v685, 0
    %v692 = vsel %vm217, %v687, 0
    %694 = vmatprep.subr.bf16.mxu0 0
    %695 = vmatpush1.bf16.msra.mxu0 %v692
    %696 = vmatprep.subr.bf16.mxu0 0
    %697 = vmatpush1.bf16.msra.mxu0 0
    %698 = vmatprep.subr.bf16.mxu0 0
    %699 = vmatpush1.bf16.msra.mxu0 0
    %700 = vmatprep.subr.bf16.mxu0 0
    %701 = vmatpush1.bf16.msra.mxu0 0
    %702 = vmatprep.subr.bf16.mxu0 0
    %703 = vmatpush1.bf16.msra.mxu0 0
    %704 = vmatprep.subr.bf16.mxu0 0
    %705 = vmatpush1.bf16.msra.mxu0 0
    %706 = vmatprep.subr.bf16.mxu0 0
    %707 = vmatpush1.bf16.msra.mxu0 0
    %708 = vmatprep.subr.bf16.mxu0 0
    %709 = vmatpush1.bf16.msra.mxu0 0
    %710 = vmatprep.subr.bf16.mxu0 0
    %711 = vmatpush1.bf16.msra.mxu0 0
    %712 = vmatprep.subr.bf16.mxu0 0
    %713 = vmatpush1.bf16.msra.mxu0 0
    %714 = vmatprep.subr.bf16.mxu0 0
    %715 = vmatpush1.bf16.msra.mxu0 0
    %716 = vmatprep.subr.bf16.mxu0 0
    %717 = vmatpush1.bf16.msra.mxu0 0
    %718 = vmatprep.subr.bf16.mxu0 0
    %719 = vmatpush1.bf16.msra.mxu0 0
    %720 = vmatprep.subr.bf16.mxu0 0
    %721 = vmatpush1.bf16.msra.mxu0 0
    %722 = vmatprep.subr.bf16.mxu0 0
    %723 = vmatpush1.bf16.msra.mxu0 0
    %724 = vmatprep.subr.bf16.mxu0 0
    %725 = vmatpush1.bf16.msra.mxu0 0
    %726 = vmatprep.mubr.bf16.mxu0 0
    %727 = vmatmul.mubr.bf16.gmra.mrb[0].mxu0 %v689
    %v728 = vpop.f32.mrb[0].mxu0
    %v729 = vadd.f32 0.0, %v728
    %v730 = vpop.f32.mrb[0].mxu0
    %v731 = vpop.f32.mrb[0].mxu0
    %v732 = vpop.f32.mrb[0].mxu0
    %733 = vdwg.mxu0
    %v734 = vpack.c.bf16 %v729, %v729
    %v736 = vsel %vm153, %v734, 0
    %v739 = vsel %vm217, %v143, 0
    %741 = vmatprep.subr.bf16.mxu0 0
    %742 = vmatpush1.bf16.msra.mxu0 %v739
    %743 = vmatprep.subr.bf16.mxu0 0
    %744 = vmatpush1.bf16.msra.mxu0 0
    %745 = vmatprep.subr.bf16.mxu0 0
    %746 = vmatpush1.bf16.msra.mxu0 0
    %747 = vmatprep.subr.bf16.mxu0 0
    %748 = vmatpush1.bf16.msra.mxu0 0
    %749 = vmatprep.subr.bf16.mxu0 0
    %750 = vmatpush1.bf16.msra.mxu0 0
    %751 = vmatprep.subr.bf16.mxu0 0
    %752 = vmatpush1.bf16.msra.mxu0 0
    %753 = vmatprep.subr.bf16.mxu0 0
    %754 = vmatpush1.bf16.msra.mxu0 0
    %755 = vmatprep.subr.bf16.mxu0 0
    %756 = vmatpush1.bf16.msra.mxu0 0
    %757 = vmatprep.subr.bf16.mxu0 0
    %758 = vmatpush1.bf16.msra.mxu0 0
    %759 = vmatprep.subr.bf16.mxu0 0
    %760 = vmatpush1.bf16.msra.mxu0 0
    %761 = vmatprep.subr.bf16.mxu0 0
    %762 = vmatpush1.bf16.msra.mxu0 0
    %763 = vmatprep.subr.bf16.mxu0 0
    %764 = vmatpush1.bf16.msra.mxu0 0
    %765 = vmatprep.subr.bf16.mxu0 0
    %766 = vmatpush1.bf16.msra.mxu0 0
    %767 = vmatprep.subr.bf16.mxu0 0
    %768 = vmatpush1.bf16.msra.mxu0 0
    %769 = vmatprep.subr.bf16.mxu0 0
    %770 = vmatpush1.bf16.msra.mxu0 0
    %771 = vmatprep.subr.bf16.mxu0 0
    %772 = vmatpush1.bf16.msra.mxu0 0
    %773 = vmatprep.mubr.bf16.mxu0 0
    %774 = vmatmul.mubr.bf16.gmra.mrb[0].mxu0 %v736
    %v775 = vpop.f32.mrb[0].mxu0
    %v776 = vadd.f32 0.0, %v775
    %v777 = vpop.f32.mrb[0].mxu0
    %v778 = vpop.f32.mrb[0].mxu0
    %v779 = vpop.f32.mrb[0].mxu0
    %780 = vdwg.mxu0
    %v781 = vadd.f32 %v623, %v776
    %v783 = vlaneseq
    %v784 = vshrl.u32 %v783, 7
    %v785 = vsub.s32 0, %v784
    %v786 = vrot.slane %v144, %v785
    %v788 = vadd.f32 %v781, %v786
    %v789 = vadd.f32 %v69, %v788
    %v790 = vsel %vm95, %v789, 0.0
    %791 = vadd.xlane.f32.xlu0 %v790
    %v792 = vpop.xlane.xlu0 %791
    %v793 = vrcp.pop 32.0
    %v794 = vmul.f32 %v792, %v793
    %v795 = vsub.f32 %v789, %v794
    %v796 = vmul.f32 %v795, %v795
    %v797 = vsel %vm95, %v796, 0.0
    %798 = vadd.xlane.f32.xlu0 %v797
    %v799 = vpop.xlane.xlu0 %798
    %v800 = vmul.f32 %v799, %v793
    %v801 = vadd.f32 %v800, 1e-05
    %v802 = vrsqrt.pop %v801
    %v803 = vmul.f32 %v795, %v802
    %v805 = vlaneseq
    %v806 = vshrl.u32 %v805, 7
    %v807 = vsub.s32 0, %v806
    %v808 = vrot.slane %v145, %v807
    %v810 = vmul.f32 %v803, %v808
    %v812 = vlaneseq
    %v813 = vshrl.u32 %v812, 7
    %v814 = vsub.s32 0, %v813
    %v815 = vrot.slane %v146, %v814
    %v817 = vadd.f32 %v810, %v815
    %818 = vst.msk [vmem:[#allocation8] sm:$0xff] %vm95, %v817
    %v819 = vmul.f32 %v137, 0.35355338
    %v820 = vpack.c.bf16 %v819, %v819
    %v821 = vpack.c.bf16 %v137, %v137
    %823 = vrot.lane.b32.xlu0 %v821, 96
    %v824 = vpop.permute.xlu0 %823
    %v826 = vsel %vm153, %v820, 0
    %v829 = vsel %vm153, %v824, 0
    %831 = vmatprep.subr.bf16.mxu0 0
    %832 = vmatpush1.bf16.xpose.msra.mxu0 %v829
    %833 = vmatprep.subr.bf16.mxu0 0
    %834 = vmatpush1.bf16.xpose.msra.mxu0 0
    %835 = vmatprep.subr.bf16.mxu0 0
    %836 = vmatpush1.bf16.xpose.msra.mxu0 0
    %837 = vmatprep.subr.bf16.mxu0 0
    %838 = vmatpush1.bf16.xpose.msra.mxu0 0
    %839 = vmatprep.subr.bf16.mxu0 0
    %840 = vmatpush1.bf16.xpose.msra.mxu0 0
    %841 = vmatprep.subr.bf16.mxu0 0
    %842 = vmatpush1.bf16.xpose.msra.mxu0 0
    %843 = vmatprep.subr.bf16.mxu0 0
    %844 = vmatpush1.bf16.xpose.msra.mxu0 0
    %845 = vmatprep.subr.bf16.mxu0 0
    %846 = vmatpush1.bf16.xpose.msra.mxu0 0
    %847 = vmatprep.subr.bf16.mxu0 0
    %848 = vmatpush1.bf16.xpose.msra.mxu0 0
    %849 = vmatprep.subr.bf16.mxu0 0
    %850 = vmatpush1.bf16.xpose.msra.mxu0 0
    %851 = vmatprep.subr.bf16.mxu0 0
    %852 = vmatpush1.bf16.xpose.msra.mxu0 0
    %853 = vmatprep.subr.bf16.mxu0 0
    %854 = vmatpush1.bf16.xpose.msra.mxu0 0
    %855 = vmatprep.subr.bf16.mxu0 0
    %856 = vmatpush1.bf16.xpose.msra.mxu0 0
    %857 = vmatprep.subr.bf16.mxu0 0
    %858 = vmatpush1.bf16.xpose.msra.mxu0 0
    %859 = vmatprep.subr.bf16.mxu0 0
    %860 = vmatpush1.bf16.xpose.msra.mxu0 0
    %861 = vmatprep.subr.bf16.mxu0 0
    %862 = vmatpush1.bf16.xpose.msra.mxu0 0
    %863 = vmatprep.mubr.bf16.mxu0 0
    %864 = vmatmul.mubr.bf16.gmra.mrb[0].mxu0 %v826
    %v865 = vpop.f32.mrb[0].mxu0
    %v866 = vadd.f32 0.0, %v865
    %v867 = vpop.f32.mrb[0].mxu0
    %v868 = vpop.f32.mrb[0].mxu0
    %v869 = vpop.f32.mrb[0].mxu0
    %870 = vdwg.mxu0
    %v871 = vsel %vm153, %v866, -inf
    %872 = vmax.xlane.f32.xlu0 %v871
    %v873 = vpop.xlane.xlu0 %872
    %v874 = vsub.f32 %v866, %v873
    %v875 = vmul.f32 %v874, 1.442695
    %v876 = vpow.pop %v875
    %v877 = vsel %vm153, %v876, 0.0
    %878 = vadd.xlane.f32.xlu0 %v877
    %v879 = vpop.xlane.xlu0 %878
    %v880 = vrcp.pop %v879
    %v881 = vmul.f32 %v876, %v880
    %v882 = vpack.c.bf16 %v881, %v881
    %883 = vrot.lane.b32.xlu0 %v821, 64
    %v884 = vpop.permute.xlu0 %883
    %v886 = vsel %vm153, %v882, 0
    %v889 = vsel %vm217, %v884, 0
    %891 = vmatprep.subr.bf16.mxu0 0
    %892 = vmatpush1.bf16.msra.mxu0 %v889
    %893 = vmatprep.subr.bf16.mxu0 0
    %894 = vmatpush1.bf16.msra.mxu0 0
    %895 = vmatprep.subr.bf16.mxu0 0
    %896 = vmatpush1.bf16.msra.mxu0 0
    %897 = vmatprep.subr.bf16.mxu0 0
    %898 = vmatpush1.bf16.msra.mxu0 0
    %899 = vmatprep.subr.bf16.mxu0 0
    %900 = vmatpush1.bf16.msra.mxu0 0
    %901 = vmatprep.subr.bf16.mxu0 0
    %902 = vmatpush1.bf16.msra.mxu0 0
    %903 = vmatprep.subr.bf16.mxu0 0
    %904 = vmatpush1.bf16.msra.mxu0 0
    %905 = vmatprep.subr.bf16.mxu0 0
    %906 = vmatpush1.bf16.msra.mxu0 0
    %907 = vmatprep.subr.bf16.mxu0 0
    %908 = vmatpush1.bf16.msra.mxu0 0
    %909 = vmatprep.subr.bf16.mxu0 0
    %910 = vmatpush1.bf16.msra.mxu0 0
    %911 = vmatprep.subr.bf16.mxu0 0
    %912 = vmatpush1.bf16.msra.mxu0 0
    %913 = vmatprep.subr.bf16.mxu0 0
    %914 = vmatpush1.bf16.msra.mxu0 0
    %915 = vmatprep.subr.bf16.mxu0 0
    %916 = vmatpush1.bf16.msra.mxu0 0
    %917 = vmatprep.subr.bf16.mxu0 0
    %918 = vmatpush1.bf16.msra.mxu0 0
    %919 = vmatprep.subr.bf16.mxu0 0
    %920 = vmatpush1.bf16.msra.mxu0 0
    %921 = vmatprep.subr.bf16.mxu0 0
    %922 = vmatpush1.bf16.msra.mxu0 0
    %923 = vmatprep.mubr.bf16.mxu0 0
    %924 = vmatmul.mubr.bf16.gmra.mrb[0].mxu0 %v886
    %v925 = vpop.f32.mrb[0].mxu0
    %v926 = vadd.f32 0.0, %v925
    %v927 = vpop.f32.mrb[0].mxu0
    %v928 = vpop.f32.mrb[0].mxu0
    %v929 = vpop.f32.mrb[0].mxu0
    %930 = vdwg.mxu0
    %v931 = vpack.c.bf16 %v926, %v926
    %933 = vrot.lane.b32.xlu0 %v820, 120
    %v934 = vpop.permute.xlu0 %933
    %935 = vrot.lane.b32.xlu0 %v821, 88
    %v936 = vpop.permute.xlu0 %935
    %v938 = vsel %vm153, %v934, 0
    %v941 = vsel %vm153, %v936, 0
    %943 = vmatprep.subr.bf16.mxu0 0
    %944 = vmatpush1.bf16.xpose.msra.mxu0 %v941
    %945 = vmatprep.subr.bf16.mxu0 0
    %946 = vmatpush1.bf16.xpose.msra.mxu0 0
    %947 = vmatprep.subr.bf16.mxu0 0
    %948 = vmatpush1.bf16.xpose.msra.mxu0 0
    %949 = vmatprep.subr.bf16.mxu0 0
    %950 = vmatpush1.bf16.xpose.msra.mxu0 0
    %951 = vmatprep.subr.bf16.mxu0 0
    %952 = vmatpush1.bf16.xpose.msra.mxu0 0
    %953 = vmatprep.subr.bf16.mxu0 0
    %954 = vmatpush1.bf16.xpose.msra.mxu0 0
    %955 = vmatprep.subr.bf16.mxu0 0
    %956 = vmatpush1.bf16.xpose.msra.mxu0 0
    %957 = vmatprep.subr.bf16.mxu0 0
    %958 = vmatpush1.bf16.xpose.msra.mxu0 0
    %959 = vmatprep.subr.bf16.mxu0 0
    %960 = vmatpush1.bf16.xpose.msra.mxu0 0
    %961 = vmatprep.subr.bf16.mxu0 0
    %962 = vmatpush1.bf16.xpose.msra.mxu0 0
    %963 = vmatprep.subr.bf16.mxu0 0
    %964 = vmatpush1.bf16.xpose.msra.mxu0 0
    %965 = vmatprep.subr.bf16.mxu0 0
    %966 = vmatpush1.bf16.xpose.msra.mxu0 0
    %967 = vmatprep.subr.bf16.mxu0 0
    %968 = vmatpush1.bf16.xpose.msra.mxu0 0
    %969 = vmatprep.subr.bf16.mxu0 0
    %970 = vmatpush1.bf16.xpose.msra.mxu0 0
    %971 = vmatprep.subr.bf16.mxu0 0
    %972 = vmatpush1.bf16.xpose.msra.mxu0 0
    %973 = vmatprep.subr.bf16.mxu0 0
    %974 = vmatpush1.bf16.xpose.msra.mxu0 0
    %975 = vmatprep.mubr.bf16.mxu0 0
    %976 = vmatmul.mubr.bf16.gmra.mrb[0].mxu0 %v938
    %v977 = vpop.f32.mrb[0].mxu0
    %v978 = vadd.f32 0.0, %v977
    %v979 = vpop.f32.mrb[0].mxu0
    %v980 = vpop.f32.mrb[0].mxu0
    %v981 = vpop.f32.mrb[0].mxu0
    %982 = vdwg.mxu0
    %v983 = vsel %vm153, %v978, -inf
    %984 = vmax.xlane.f32.xlu0 %v983
    %v985 = vpop.xlane.xlu0 %984
    %v986 = vsub.f32 %v978, %v985
    %v987 = vmul.f32 %v986, 1.442695
    %v988 = vpow.pop %v987
    %v989 = vsel %vm153, %v988, 0.0
    %990 = vadd.xlane.f32.xlu0 %v989
    %v991 = vpop.xlane.xlu0 %990
    %v992 = vrcp.pop %v991
    %v993 = vmul.f32 %v988, %v992
    %v994 = vpack.c.bf16 %v993, %v993
    %995 = vrot.lane.b32.xlu0 %v821, 56
    %v996 = vpop.permute.xlu0 %995
    %v998 = vsel %vm153, %v994, 0
    %v1001 = vsel %vm217, %v996, 0
    %1003 = vmatprep.subr.bf16.mxu0 0
    %1004 = vmatpush1.bf16.msra.mxu0 %v1001
    %1005 = vmatprep.subr.bf16.mxu0 0
    %1006 = vmatpush1.bf16.msra.mxu0 0
    %1007 = vmatprep.subr.bf16.mxu0 0
    %1008 = vmatpush1.bf16.msra.mxu0 0
    %1009 = vmatprep.subr.bf16.mxu0 0
    %1010 = vmatpush1.bf16.msra.mxu0 0
    %1011 = vmatprep.subr.bf16.mxu0 0
    %1012 = vmatpush1.bf16.msra.mxu0 0
    %1013 = vmatprep.subr.bf16.mxu0 0
    %1014 = vmatpush1.bf16.msra.mxu0 0
    %1015 = vmatprep.subr.bf16.mxu0 0
    %1016 = vmatpush1.bf16.msra.mxu0 0
    %1017 = vmatprep.subr.bf16.mxu0 0
    %1018 = vmatpush1.bf16.msra.mxu0 0
    %1019 = vmatprep.subr.bf16.mxu0 0
    %1020 = vmatpush1.bf16.msra.mxu0 0
    %1021 = vmatprep.subr.bf16.mxu0 0
    %1022 = vmatpush1.bf16.msra.mxu0 0
    %1023 = vmatprep.subr.bf16.mxu0 0
    %1024 = vmatpush1.bf16.msra.mxu0 0
    %1025 = vmatprep.subr.bf16.mxu0 0
    %1026 = vmatpush1.bf16.msra.mxu0 0
    %1027 = vmatprep.subr.bf16.mxu0 0
    %1028 = vmatpush1.bf16.msra.mxu0 0
    %1029 = vmatprep.subr.bf16.mxu0 0
    %1030 = vmatpush1.bf16.msra.mxu0 0
    %1031 = vmatprep.subr.bf16.mxu0 0
    %1032 = vmatpush1.bf16.msra.mxu0 0
    %1033 = vmatprep.subr.bf16.mxu0 0
    %1034 = vmatpush1.bf16.msra.mxu0 0
    %1035 = vmatprep.mubr.bf16.mxu0 0
    %1036 = vmatmul.mubr.bf16.gmra.mrb[0].mxu0 %v998
    %v1037 = vpop.f32.mrb[0].mxu0
    %v1038 = vadd.f32 0.0, %v1037
    %v1039 = vpop.f32.mrb[0].mxu0
    %v1040 = vpop.f32.mrb[0].mxu0
    %v1041 = vpop.f32.mrb[0].mxu0
    %1042 = vdwg.mxu0
    %v1043 = vpack.c.bf16 %v1038, %v1038
    %v1045 = vsel %vm153, %v1043, 0
    %1047 = vmatprep.subr.bf16.mxu0 0
    %1048 = vmatpush1.bf16.msra.mxu0 %v378
    %1049 = vmatprep.subr.bf16.mxu0 0
    %1050 = vmatpush1.bf16.msra.mxu0 0
    %1051 = vmatprep.subr.bf16.mxu0 0
    %1052 = vmatpush1.bf16.msra.mxu0 0
    %1053 = vmatprep.subr.bf16.mxu0 0
    %1054 = vmatpush1.bf16.msra.mxu0 0
    %1055 = vmatprep.subr.bf16.mxu0 0
    %1056 = vmatpush1.bf16.msra.mxu0 0
    %1057 = vmatprep.subr.bf16.mxu0 0
    %1058 = vmatpush1.bf16.msra.mxu0 0
    %1059 = vmatprep.subr.bf16.mxu0 0
    %1060 = vmatpush1.bf16.msra.mxu0 0
    %1061 = vmatprep.subr.bf16.mxu0 0
    %1062 = vmatpush1.bf16.msra.mxu0 0
    %1063 = vmatprep.subr.bf16.mxu0 0
    %1064 = vmatpush1.bf16.msra.mxu0 0
    %1065 = vmatprep.subr.bf16.mxu0 0
    %1066 = vmatpush1.bf16.msra.mxu0 0
    %1067 = vmatprep.subr.bf16.mxu0 0
    %1068 = vmatpush1.bf16.msra.mxu0 0
    %1069 = vmatprep.subr.bf16.mxu0 0
    %1070 = vmatpush1.bf16.msra.mxu0 0
    %1071 = vmatprep.subr.bf16.mxu0 0
    %1072 = vmatpush1.bf16.msra.mxu0 0
    %1073 = vmatprep.subr.bf16.mxu0 0
    %1074 = vmatpush1.bf16.msra.mxu0 0
    %1075 = vmatprep.subr.bf16.mxu0 0
    %1076 = vmatpush1.bf16.msra.mxu0 0
    %1077 = vmatprep.subr.bf16.mxu0 0
    %1078 = vmatpush1.bf16.msra.mxu0 0
    %1079 = vmatprep.mubr.bf16.mxu0 0
    %1080 = vmatmul.mubr.bf16.gmra.mrb[0].mxu0 %v1045
    %v1081 = vpop.f32.mrb[0].mxu0
    %v1082 = vadd.f32 0.0, %v1081
    %v1083 = vpop.f32.mrb[0].mxu0
    %v1084 = vpop.f32.mrb[0].mxu0
    %v1085 = vpop.f32.mrb[0].mxu0
    %1086 = vdwg.mxu0
    %v1088 = vsel %vm153, %v931, 0
    %1090 = vmatprep.subr.bf16.mxu0 0
    %1091 = vmatpush1.bf16.msra.mxu0 %v424
    %1092 = vmatprep.subr.bf16.mxu0 0
    %1093 = vmatpush1.bf16.msra.mxu0 0
    %1094 = vmatprep.subr.bf16.mxu0 0
    %1095 = vmatpush1.bf16.msra.mxu0 0
    %1096 = vmatprep.subr.bf16.mxu0 0
    %1097 = vmatpush1.bf16.msra.mxu0 0
    %1098 = vmatprep.subr.bf16.mxu0 0
    %1099 = vmatpush1.bf16.msra.mxu0 0
    %1100 = vmatprep.subr.bf16.mxu0 0
    %1101 = vmatpush1.bf16.msra.mxu0 0
    %1102 = vmatprep.subr.bf16.mxu0 0
    %1103 = vmatpush1.bf16.msra.mxu0 0
    %1104 = vmatprep.subr.bf16.mxu0 0
    %1105 = vmatpush1.bf16.msra.mxu0 0
    %1106 = vmatprep.subr.bf16.mxu0 0
    %1107 = vmatpush1.bf16.msra.mxu0 0
    %1108 = vmatprep.subr.bf16.mxu0 0
    %1109 = vmatpush1.bf16.msra.mxu0 0
    %1110 = vmatprep.subr.bf16.mxu0 0
    %1111 = vmatpush1.bf16.msra.mxu0 0
    %1112 = vmatprep.subr.bf16.mxu0 0
    %1113 = vmatpush1.bf16.msra.mxu0 0
    %1114 = vmatprep.subr.bf16.mxu0 0
    %1115 = vmatpush1.bf16.msra.mxu0 0
    %1116 = vmatprep.subr.bf16.mxu0 0
    %1117 = vmatpush1.bf16.msra.mxu0 0
    %1118 = vmatprep.subr.bf16.mxu0 0
    %1119 = vmatpush1.bf16.msra.mxu0 0
    %1120 = vmatprep.subr.bf16.mxu0 0
    %1121 = vmatpush1.bf16.msra.mxu0 0
    %1122 = vmatprep.mubr.bf16.mxu0 0
    %1123 = vmatmul.mubr.bf16.gmra.mrb[0].mxu0 %v1088
    %v1124 = vpop.f32.mrb[0].mxu0
    %v1125 = vadd.f32 %v1082, %v1124
    %v1126 = vpop.f32.mrb[0].mxu0
    %v1127 = vpop.f32.mrb[0].mxu0
    %v1128 = vpop.f32.mrb[0].mxu0
    %1129 = vdwg.mxu0
    %1130 = vrot.lane.b32.xlu0 %v820, 112
    %v1131 = vpop.permute.xlu0 %1130
    %1132 = vrot.lane.b32.xlu0 %v821, 80
    %v1133 = vpop.permute.xlu0 %1132
    %v1135 = vsel %vm153, %v1131, 0
    %v1138 = vsel %vm153, %v1133, 0
    %1140 = vmatprep.subr.bf16.mxu0 0
    %1141 = vmatpush1.bf16.xpose.msra.mxu0 %v1138
    %1142 = vmatprep.subr.bf16.mxu0 0
    %1143 = vmatpush1.bf16.xpose.msra.mxu0 0
    %1144 = vmatprep.subr.bf16.mxu0 0
    %1145 = vmatpush1.bf16.xpose.msra.mxu0 0
    %1146 = vmatprep.subr.bf16.mxu0 0
    %1147 = vmatpush1.bf16.xpose.msra.mxu0 0
    %1148 = vmatprep.subr.bf16.mxu0 0
    %1149 = vmatpush1.bf16.xpose.msra.mxu0 0
    %1150 = vmatprep.subr.bf16.mxu0 0
    %1151 = vmatpush1.bf16.xpose.msra.mxu0 0
    %1152 = vmatprep.subr.bf16.mxu0 0
    %1153 = vmatpush1.bf16.xpose.msra.mxu0 0
    %1154 = vmatprep.subr.bf16.mxu0 0
    %1155 = vmatpush1.bf16.xpose.msra.mxu0 0
    %1156 = vmatprep.subr.bf16.mxu0 0
    %1157 = vmatpush1.bf16.xpose.msra.mxu0 0
    %1158 = vmatprep.subr.bf16.mxu0 0
    %1159 = vmatpush1.bf16.xpose.msra.mxu0 0
    %1160 = vmatprep.subr.bf16.mxu0 0
    %1161 = vmatpush1.bf16.xpose.msra.mxu0 0
    %1162 = vmatprep.subr.bf16.mxu0 0
    %1163 = vmatpush1.bf16.xpose.msra.mxu0 0
    %1164 = vmatprep.subr.bf16.mxu0 0
    %1165 = vmatpush1.bf16.xpose.msra.mxu0 0
    %1166 = vmatprep.subr.bf16.mxu0 0
    %1167 = vmatpush1.bf16.xpose.msra.mxu0 0
    %1168 = vmatprep.subr.bf16.mxu0 0
    %1169 = vmatpush1.bf16.xpose.msra.mxu0 0
    %1170 = vmatprep.subr.bf16.mxu0 0
    %1171 = vmatpush1.bf16.xpose.msra.mxu0 0
    %1172 = vmatprep.mubr.bf16.mxu0 0
    %1173 = vmatmul.mubr.bf16.gmra.mrb[0].mxu0 %v1135
    %v1174 = vpop.f32.mrb[0].mxu0
    %v1175 = vadd.f32 0.0, %v1174
    %v1176 = vpop.f32.mrb[0].mxu0
    %v1177 = vpop.f32.mrb[0].mxu0
    %v1178 = vpop.f32.mrb[0].mxu0
    %1179 = vdwg.mxu0
    %v1180 = vsel %vm153, %v1175, -inf
    %1181 = vmax.xlane.f32.xlu0 %v1180
    %v1182 = vpop.xlane.xlu0 %1181
    %v1183 = vsub.f32 %v1175, %v1182
    %v1184 = vmul.f32 %v1183, 1.442695
    %v1185 = vpow.pop %v1184
    %v1186 = vsel %vm153, %v1185, 0.0
    %1187 = vadd.xlane.f32.xlu0 %v1186
    %v1188 = vpop.xlane.xlu0 %1187
    %v1189 = vrcp.pop %v1188
    %v1190 = vmul.f32 %v1185, %v1189
    %v1191 = vpack.c.bf16 %v1190, %v1190
    %1192 = vrot.lane.b32.xlu0 %v821, 48
    %v1193 = vpop.permute.xlu0 %1192
    %v1195 = vsel %vm153, %v1191, 0
    %v1198 = vsel %vm217, %v1193, 0
    %1200 = vmatprep.subr.bf16.mxu0 0
    %1201 = vmatpush1.bf16.msra.mxu0 %v1198
    %1202 = vmatprep.subr.bf16.mxu0 0
    %1203 = vmatpush1.bf16.msra.mxu0 0
    %1204 = vmatprep.subr.bf16.mxu0 0
    %1205 = vmatpush1.bf16.msra.mxu0 0
    %1206 = vmatprep.subr.bf16.mxu0 0
    %1207 = vmatpush1.bf16.msra.mxu0 0
    %1208 = vmatprep.subr.bf16.mxu0 0
    %1209 = vmatpush1.bf16.msra.mxu0 0
    %1210 = vmatprep.subr.bf16.mxu0 0
    %1211 = vmatpush1.bf16.msra.mxu0 0
    %1212 = vmatprep.subr.bf16.mxu0 0
    %1213 = vmatpush1.bf16.msra.mxu0 0
    %1214 = vmatprep.subr.bf16.mxu0 0
    %1215 = vmatpush1.bf16.msra.mxu0 0
    %1216 = vmatprep.subr.bf16.mxu0 0
    %1217 = vmatpush1.bf16.msra.mxu0 0
    %1218 = vmatprep.subr.bf16.mxu0 0
    %1219 = vmatpush1.bf16.msra.mxu0 0
    %1220 = vmatprep.subr.bf16.mxu0 0
    %1221 = vmatpush1.bf16.msra.mxu0 0
    %1222 = vmatprep.subr.bf16.mxu0 0
    %1223 = vmatpush1.bf16.msra.mxu0 0
    %1224 = vmatprep.subr.bf16.mxu0 0
    %1225 = vmatpush1.bf16.msra.mxu0 0
    %1226 = vmatprep.subr.bf16.mxu0 0
    %1227 = vmatpush1.bf16.msra.mxu0 0
    %1228 = vmatprep.subr.bf16.mxu0 0
    %1229 = vmatpush1.bf16.msra.mxu0 0
    %1230 = vmatprep.subr.bf16.mxu0 0
    %1231 = vmatpush1.bf16.msra.mxu0 0
    %1232 = vmatprep.mubr.bf16.mxu0 0
    %1233 = vmatmul.mubr.bf16.gmra.mrb[0].mxu0 %v1195
    %v1234 = vpop.f32.mrb[0].mxu0
    %v1235 = vadd.f32 0.0, %v1234
    %v1236 = vpop.f32.mrb[0].mxu0
    %v1237 = vpop.f32.mrb[0].mxu0
    %v1238 = vpop.f32.mrb[0].mxu0
    %1239 = vdwg.mxu0
    %v1240 = vpack.c.bf16 %v1235, %v1235
    %v1242 = vsel %vm153, %v1240, 0
    %1244 = vmatprep.subr.bf16.mxu0 0
    %1245 = vmatpush1.bf16.msra.mxu0 %v581
    %1246 = vmatprep.subr.bf16.mxu0 0
    %1247 = vmatpush1.bf16.msra.mxu0 0
    %1248 = vmatprep.subr.bf16.mxu0 0
    %1249 = vmatpush1.bf16.msra.mxu0 0
    %1250 = vmatprep.subr.bf16.mxu0 0
    %1251 = vmatpush1.bf16.msra.mxu0 0
    %1252 = vmatprep.subr.bf16.mxu0 0
    %1253 = vmatpush1.bf16.msra.mxu0 0
    %1254 = vmatprep.subr.bf16.mxu0 0
    %1255 = vmatpush1.bf16.msra.mxu0 0
    %1256 = vmatprep.subr.bf16.mxu0 0
    %1257 = vmatpush1.bf16.msra.mxu0 0
    %1258 = vmatprep.subr.bf16.mxu0 0
    %1259 = vmatpush1.bf16.msra.mxu0 0
    %1260 = vmatprep.subr.bf16.mxu0 0
    %1261 = vmatpush1.bf16.msra.mxu0 0
    %1262 = vmatprep.subr.bf16.mxu0 0
    %1263 = vmatpush1.bf16.msra.mxu0 0
    %1264 = vmatprep.subr.bf16.mxu0 0
    %1265 = vmatpush1.bf16.msra.mxu0 0
    %1266 = vmatprep.subr.bf16.mxu0 0
    %1267 = vmatpush1.bf16.msra.mxu0 0
    %1268 = vmatprep.subr.bf16.mxu0 0
    %1269 = vmatpush1.bf16.msra.mxu0 0
    %1270 = vmatprep.subr.bf16.mxu0 0
    %1271 = vmatpush1.bf16.msra.mxu0 0
    %1272 = vmatprep.subr.bf16.mxu0 0
    %1273 = vmatpush1.bf16.msra.mxu0 0
    %1274 = vmatprep.subr.bf16.mxu0 0
    %1275 = vmatpush1.bf16.msra.mxu0 0
    %1276 = vmatprep.mubr.bf16.mxu0 0
    %1277 = vmatmul.mubr.bf16.gmra.mrb[0].mxu0 %v1242
    %v1278 = vpop.f32.mrb[0].mxu0
    %v1279 = vadd.f32 0.0, %v1278
    %v1280 = vpop.f32.mrb[0].mxu0
    %v1281 = vpop.f32.mrb[0].mxu0
    %v1282 = vpop.f32.mrb[0].mxu0
    %1283 = vdwg.mxu0
    %v1284 = vadd.f32 %v1125, %v1279
    %1285 = vrot.lane.b32.xlu0 %v820, 104
    %v1286 = vpop.permute.xlu0 %1285
    %1287 = vrot.lane.b32.xlu0 %v821, 72
    %v1288 = vpop.permute.xlu0 %1287
    %v1290 = vsel %vm153, %v1286, 0
    %v1293 = vsel %vm153, %v1288, 0
    %1295 = vmatprep.subr.bf16.mxu0 0
    %1296 = vmatpush1.bf16.xpose.msra.mxu0 %v1293
    %1297 = vmatprep.subr.bf16.mxu0 0
    %1298 = vmatpush1.bf16.xpose.msra.mxu0 0
    %1299 = vmatprep.subr.bf16.mxu0 0
    %1300 = vmatpush1.bf16.xpose.msra.mxu0 0
    %1301 = vmatprep.subr.bf16.mxu0 0
    %1302 = vmatpush1.bf16.xpose.msra.mxu0 0
    %1303 = vmatprep.subr.bf16.mxu0 0
    %1304 = vmatpush1.bf16.xpose.msra.mxu0 0
    %1305 = vmatprep.subr.bf16.mxu0 0
    %1306 = vmatpush1.bf16.xpose.msra.mxu0 0
    %1307 = vmatprep.subr.bf16.mxu0 0
    %1308 = vmatpush1.bf16.xpose.msra.mxu0 0
    %1309 = vmatprep.subr.bf16.mxu0 0
    %1310 = vmatpush1.bf16.xpose.msra.mxu0 0
    %1311 = vmatprep.subr.bf16.mxu0 0
    %1312 = vmatpush1.bf16.xpose.msra.mxu0 0
    %1313 = vmatprep.subr.bf16.mxu0 0
    %1314 = vmatpush1.bf16.xpose.msra.mxu0 0
    %1315 = vmatprep.subr.bf16.mxu0 0
    %1316 = vmatpush1.bf16.xpose.msra.mxu0 0
    %1317 = vmatprep.subr.bf16.mxu0 0
    %1318 = vmatpush1.bf16.xpose.msra.mxu0 0
    %1319 = vmatprep.subr.bf16.mxu0 0
    %1320 = vmatpush1.bf16.xpose.msra.mxu0 0
    %1321 = vmatprep.subr.bf16.mxu0 0
    %1322 = vmatpush1.bf16.xpose.msra.mxu0 0
    %1323 = vmatprep.subr.bf16.mxu0 0
    %1324 = vmatpush1.bf16.xpose.msra.mxu0 0
    %1325 = vmatprep.subr.bf16.mxu0 0
    %1326 = vmatpush1.bf16.xpose.msra.mxu0 0
    %1327 = vmatprep.mubr.bf16.mxu0 0
    %1328 = vmatmul.mubr.bf16.gmra.mrb[0].mxu0 %v1290
    %v1329 = vpop.f32.mrb[0].mxu0
    %v1330 = vadd.f32 0.0, %v1329
    %v1331 = vpop.f32.mrb[0].mxu0
    %v1332 = vpop.f32.mrb[0].mxu0
    %v1333 = vpop.f32.mrb[0].mxu0
    %1334 = vdwg.mxu0
    %v1335 = vsel %vm153, %v1330, -inf
    %1336 = vmax.xlane.f32.xlu0 %v1335
    %v1337 = vpop.xlane.xlu0 %1336
    %v1338 = vsub.f32 %v1330, %v1337
    %v1339 = vmul.f32 %v1338, 1.442695
    %v1340 = vpow.pop %v1339
    %v1341 = vsel %vm153, %v1340, 0.0
    %1342 = vadd.xlane.f32.xlu0 %v1341
    %v1343 = vpop.xlane.xlu0 %1342
    %v1344 = vrcp.pop %v1343
    %v1345 = vmul.f32 %v1340, %v1344
    %v1346 = vpack.c.bf16 %v1345, %v1345
    %1347 = vrot.lane.b32.xlu0 %v821, 40
    %v1348 = vpop.permute.xlu0 %1347
    %v1350 = vsel %vm153, %v1346, 0
    %v1353 = vsel %vm217, %v1348, 0
    %1355 = vmatprep.subr.bf16.mxu0 0
    %1356 = vmatpush1.bf16.msra.mxu0 %v1353
    %1357 = vmatprep.subr.bf16.mxu0 0
    %1358 = vmatpush1.bf16.msra.mxu0 0
    %1359 = vmatprep.subr.bf16.mxu0 0
    %1360 = vmatpush1.bf16.msra.mxu0 0
    %1361 = vmatprep.subr.bf16.mxu0 0
    %1362 = vmatpush1.bf16.msra.mxu0 0
    %1363 = vmatprep.subr.bf16.mxu0 0
    %1364 = vmatpush1.bf16.msra.mxu0 0
    %1365 = vmatprep.subr.bf16.mxu0 0
    %1366 = vmatpush1.bf16.msra.mxu0 0
    %1367 = vmatprep.subr.bf16.mxu0 0
    %1368 = vmatpush1.bf16.msra.mxu0 0
    %1369 = vmatprep.subr.bf16.mxu0 0
    %1370 = vmatpush1.bf16.msra.mxu0 0
    %1371 = vmatprep.subr.bf16.mxu0 0
    %1372 = vmatpush1.bf16.msra.mxu0 0
    %1373 = vmatprep.subr.bf16.mxu0 0
    %1374 = vmatpush1.bf16.msra.mxu0 0
    %1375 = vmatprep.subr.bf16.mxu0 0
    %1376 = vmatpush1.bf16.msra.mxu0 0
    %1377 = vmatprep.subr.bf16.mxu0 0
    %1378 = vmatpush1.bf16.msra.mxu0 0
    %1379 = vmatprep.subr.bf16.mxu0 0
    %1380 = vmatpush1.bf16.msra.mxu0 0
    %1381 = vmatprep.subr.bf16.mxu0 0
    %1382 = vmatpush1.bf16.msra.mxu0 0
    %1383 = vmatprep.subr.bf16.mxu0 0
    %1384 = vmatpush1.bf16.msra.mxu0 0
    %1385 = vmatprep.subr.bf16.mxu0 0
    %1386 = vmatpush1.bf16.msra.mxu0 0
    %1387 = vmatprep.mubr.bf16.mxu0 0
    %1388 = vmatmul.mubr.bf16.gmra.mrb[0].mxu0 %v1350
    %v1389 = vpop.f32.mrb[0].mxu0
    %v1390 = vadd.f32 0.0, %v1389
    %v1391 = vpop.f32.mrb[0].mxu0
    %v1392 = vpop.f32.mrb[0].mxu0
    %v1393 = vpop.f32.mrb[0].mxu0
    %1394 = vdwg.mxu0
    %v1395 = vpack.c.bf16 %v1390, %v1390
    %v1397 = vsel %vm153, %v1395, 0
    %1399 = vmatprep.subr.bf16.mxu0 0
    %1400 = vmatpush1.bf16.msra.mxu0 %v739
    %1401 = vmatprep.subr.bf16.mxu0 0
    %1402 = vmatpush1.bf16.msra.mxu0 0
    %1403 = vmatprep.subr.bf16.mxu0 0
    %1404 = vmatpush1.bf16.msra.mxu0 0
    %1405 = vmatprep.subr.bf16.mxu0 0
    %1406 = vmatpush1.bf16.msra.mxu0 0
    %1407 = vmatprep.subr.bf16.mxu0 0
    %1408 = vmatpush1.bf16.msra.mxu0 0
    %1409 = vmatprep.subr.bf16.mxu0 0
    %1410 = vmatpush1.bf16.msra.mxu0 0
    %1411 = vmatprep.subr.bf16.mxu0 0
    %1412 = vmatpush1.bf16.msra.mxu0 0
    %1413 = vmatprep.subr.bf16.mxu0 0
    %1414 = vmatpush1.bf16.msra.mxu0 0
    %1415 = vmatprep.subr.bf16.mxu0 0
    %1416 = vmatpush1.bf16.msra.mxu0 0
    %1417 = vmatprep.subr.bf16.mxu0 0
    %1418 = vmatpush1.bf16.msra.mxu0 0
    %1419 = vmatprep.subr.bf16.mxu0 0
    %1420 = vmatpush1.bf16.msra.mxu0 0
    %1421 = vmatprep.subr.bf16.mxu0 0
    %1422 = vmatpush1.bf16.msra.mxu0 0
    %1423 = vmatprep.subr.bf16.mxu0 0
    %1424 = vmatpush1.bf16.msra.mxu0 0
    %1425 = vmatprep.subr.bf16.mxu0 0
    %1426 = vmatpush1.bf16.msra.mxu0 0
    %1427 = vmatprep.subr.bf16.mxu0 0
    %1428 = vmatpush1.bf16.msra.mxu0 0
    %1429 = vmatprep.subr.bf16.mxu0 0
    %1430 = vmatpush1.bf16.msra.mxu0 0
    %1431 = vmatprep.mubr.bf16.mxu0 0
    %1432 = vmatmul.mubr.bf16.gmra.mrb[0].mxu0 %v1397
    %v1433 = vpop.f32.mrb[0].mxu0
    %v1434 = vadd.f32 0.0, %v1433
    %v1435 = vpop.f32.mrb[0].mxu0
    %v1436 = vpop.f32.mrb[0].mxu0
    %v1437 = vpop.f32.mrb[0].mxu0
    %1438 = vdwg.mxu0
    %v1439 = vadd.f32 %v1284, %v1434
    %v1440 = vadd.f32 %v1439, %v786
    %v1441 = vadd.f32 %v70, %v1440
    %v1442 = vsel %vm95, %v1441, 0.0
    %1443 = vadd.xlane.f32.xlu0 %v1442
    %v1444 = vpop.xlane.xlu0 %1443
    %v1445 = vmul.f32 %v1444, %v793
    %v1446 = vsub.f32 %v1441, %v1445
    %v1447 = vmul.f32 %v1446, %v1446
    %v1448 = vsel %vm95, %v1447, 0.0
    %1449 = vadd.xlane.f32.xlu0 %v1448
    %v1450 = vpop.xlane.xlu0 %1449
    %v1451 = vmul.f32 %v1450, %v793
    %v1452 = vadd.f32 %v1451, 1e-05
    %v1453 = vrsqrt.pop %v1452
    %v1454 = vmul.f32 %v1446, %v1453
    %v1455 = vmul.f32 %v1454, %v808
    %v1456 = vadd.f32 %v1455, %v815
    %s1457 = scalar_lea.vmem [#allocation8], 8
    %1458 = vst.msk [vmem:[%s1457] sm:$0xff] %vm95, %v1456
    // Predicated region
    $region42: #{tpu_custom_call.1} parent=1 // pred_check
      _
    $region43: #{tpu_custom_call.1} parent=1 // pred_check_branch
      %1460 = sbr.rel (0) target = $region45
    $region44: #{tpu_custom_call.1} parent=1 // pred_region
      %s1462 = ssub.s32 256, 256
      %1463 = vsyncadd [#allocation4], %s1462
      %s1464 = sshll.u32 [#allocation8], 4
      %s1465 = int_to_ptr.vmem [resolvable:$true] %s1464
      %1470 = dma.vmem_to_hbm [thread:$0]  %s1465, 256, %s7, [#allocation4], 128, 128, 8
    $region45: #{tpu_custom_call.1} parent=1 // pred_fallthru
      _
    // Predicated region
    $region46: #{tpu_custom_call.1} parent=1 // pred_check
      _
    $region47: #{tpu_custom_call.1} parent=1 // pred_check_branch
      %1472 = sbr.rel (0) target = $region49
    $region48: #{tpu_custom_call.1} parent=1 // pred_region
      %1473 = dma.done [#allocation4], 256
    $region49: #{tpu_custom_call.1} parent=1 // pred_fallthru
      _
    %1474 = vsyncpa [#allocation3], 1
    %1475 = vsyncpa [#allocation6], 1
    %1476 = vsyncpa [#allocation4], 1

</llo_original>
